<compile_context>
chip_gen: v7x
topology: tpu7x:2x2x1
jax: 0.10.0
libtpu: 0.0.40
codegen_flags: <defaults>
</compile_context>

<pallas_src>
from functools import partial

import jax
import jax.numpy as jnp
from jax.experimental import pallas as pl
from jax.experimental.pallas import tpu as pltpu

F32 = jnp.float32


def sam_kernel(x_ref, w_ref, out_ref, st_ref, *, H, W, bb):
    """Fused SAM forward for a block of `bb` images.

    x_ref   : (bb, C, H*W)      f32 VMEM -- input activations, lane-dense
    w_ref   : (98,)             f32 SMEM -- conv weights, index 2*(kh*7+kw)+c
                                            (c=0 -> mean map, c=1 -> max map)
    out_ref : (bb, C, H*W)      f32 VMEM -- x * spatial_attention
    st_ref  : (2, bb, H+6, W+6) f32 VMEM -- zero-padded mean/max maps (scratch)
    """
    Hp, Wp = H + 6, W + 6

    x = x_ref[...]                                   # (bb, C, H*W)

    # ---- Channel statistics (stay on-chip) -------------------------------
    cmean = jnp.mean(x, axis=1)                      # (bb, H*W)
    cmax = jnp.max(x, axis=1)                        # (bb, H*W)

    # ---- In-kernel zero padding: only the 3-wide halo strips -------------
    # (interior is fully overwritten below; do NOT guard with program_id==0,
    #  that breaks under megacore "parallel" sharding on v7x)
    st_ref[:, :, 0:3, :] = jnp.zeros((2, bb, 3, Wp), F32)
    st_ref[:, :, 3 + H:Hp, :] = jnp.zeros((2, bb, 3, Wp), F32)
    st_ref[:, :, 3:3 + H, 0:3] = jnp.zeros((2, bb, H, 3), F32)
    st_ref[:, :, 3:3 + H, 3 + W:Wp] = jnp.zeros((2, bb, H, 3), F32)

    st_ref[0, :, 3:3 + H, 3:3 + W] = cmean.reshape(bb, H, W)
    st_ref[1, :, 3:3 + H, 3:3 + W] = cmax.reshape(bb, H, W)

    # ---- 7x7 conv: 14 row-slab loads, static kw slices, 4 acc chains -----
    accs = [jnp.zeros((bb, H, W), F32) for _ in range(4)]
    for kh in range(7):
        for c in range(2):
            rs = st_ref[c, :, kh:kh + H, :]          # (bb, H, W+6): 1 load / (kh,c)
            a = accs[(2 * kh + c) % 4]
            for kw in range(7):
                a = a + rs[:, :, kw:kw + W] * w_ref[2 * (kh * 7 + kw) + c]
            accs[(2 * kh + c) % 4] = a
    acc = (accs[0] + accs[1]) + (accs[2] + accs[3])  # (bb, H, W)

    # ---- Exact sigmoid (approx reciprocal previously blew the tolerance) -
    att = 1.0 / (1.0 + jnp.exp(-acc))                # (bb, H, W)

    # Broadcast over channels; x is already a full-lane-dense vreg slab.
    out_ref[...] = x * att.reshape(bb, 1, H * W)


def _pick_bb(B, C, H, W, budget_bytes=2 << 20):
    """Images per grid step.

    Amortizes grid-step overhead while keeping the double-buffered in+out
    block well under v7x's 64 MiB VMEM, and keeps >= 2 grid steps when B >= 2
    so the two v7x TensorCores both get work (v5e/v6e are single-TC).
    """
    per_img = C * H * W * 4 * 4          # in + out, double-buffered, f32
    max_bb = max(1, budget_bytes // per_img)
    if B >= 2:
        max_bb = min(max_bb, B // 2)     # grid length >= 2
    bb = 1
    for d in range(1, B + 1):
        if B % d == 0 and d <= max_bb:
            bb = d
    return bb


def sam(x_nchw, w_flat):
    """SAM forward. x_nchw: (B,C,H,W) f32; w_flat: (98,) f32 with w[kh,kw,c] layout."""
    B, C, H, W = x_nchw.shape
    bb = _pick_bb(B, C, H, W)
    x2 = x_nchw.reshape(B, C, H * W)     # free contiguous reshape -> lane-dense I/O

    out = pl.pallas_call(
        partial(sam_kernel, H=H, W=W, bb=bb),
        out_shape=jax.ShapeDtypeStruct((B, C, H * W), F32),
        grid_spec=pltpu.PrefetchScalarGridSpec(
            num_scalar_prefetch=0,
            grid=(B // bb,),
            in_specs=[
                pl.BlockSpec((bb, C, H * W), lambda b: (b, 0, 0)),
                pl.BlockSpec(memory_space=pltpu.MemorySpace.SMEM),
            ],
            out_specs=pl.BlockSpec((bb, C, H * W), lambda b: (b, 0, 0)),
            scratch_shapes=[pltpu.VMEM((2, bb, H + 6, W + 6), F32)],
        ),
        compiler_params=pltpu.CompilerParams(
            dimension_semantics=("parallel",),   # shard batch across TCs on v7x
        ),
    )(x2, w_flat)
    return out.reshape(B, C, H, W)


def sam_reference(x, w_flat):
    """Pure-JAX reference matching the PyTorch SAM.forward."""
    w = w_flat.reshape(7, 7, 2, 1)                                         # HWIO
    stats = jnp.stack([jnp.mean(x, axis=1), jnp.max(x, axis=1)], axis=-1)  # (B,H,W,2)
    att = jax.lax.conv_general_dilated(
        stats, w, window_strides=(1, 1), padding=((3, 3), (3, 3)),
        dimension_numbers=("NHWC", "HWIO", "NHWC"))
    att = jax.nn.sigmoid(att[..., 0])                                      # (B,H,W)
    return x * att[:, None, :, :]


if __name__ == "__main__":
    key = jax.random.PRNGKey(0)
    k_w, k_x = jax.random.split(key)
    B, C, H, W = 2, 8, 16, 16

    # PyTorch conv weight is (out=1, in=2, 7, 7); flattened here as w[kh, kw, c]
    # i.e.  w_flat = w_torch[0].transpose(1, 2, 0).reshape(98)
    w_flat = (jax.random.normal(k_w, (7, 7, 2), F32) / jnp.sqrt(98.0)).reshape(98)
    x = jax.random.normal(k_x, (B, C, H, W), F32)

    y = jax.jit(sam)(x, w_flat)
    jax.block_until_ready(y)

    y_ref = sam_reference(x, w_flat)
    err = float(jnp.max(jnp.abs(y - y_ref)))
    assert y.shape == (B, C, H, W)
    assert bool(jnp.all(jnp.isfinite(y)))
    assert err < 1e-3, f"max abs error vs reference = {err}"
    print("KERNEL_OK")
</pallas_src>

<mosaic_0001>
module attributes {stable_mosaic.version = 11 : i64} {
  func.func @sam_kernel(%arg0: i32, %arg1: memref<1x8x256xf32, #tpu.memory_space<vmem>>, %arg2: memref<98xf32, #tpu.memory_space<smem>>, %arg3: memref<1x8x256xf32, #tpu.memory_space<vmem>>, %arg4: memref<2x1x22x22xf32, #tpu.memory_space<vmem>>) attributes {dimension_semantics = [#tpu.dimension_semantics<parallel>], iteration_bounds = array<i64: 2>, scalar_prefetch = 0 : i64, scratch_operands = 1 : i64, tpu.core_type = #tpu.core_type<tc>, window_params = [{transform_indices = @transform_0, window_bounds = array<i64: 1, 8, 256>}, {transform_indices = @transform_1, window_bounds = array<i64: 98>}, {transform_indices = @transform_2, window_bounds = array<i64: 1, 8, 256>}]} {
    %c0 = arith.constant 0 : index
    %c0_0 = arith.constant 0 : index
    %c0_1 = arith.constant 0 : index
    %0 = vector.load %arg1[%c0, %c0_0, %c0_1] : memref<1x8x256xf32, #tpu.memory_space<vmem>>, vector<1x8x256xf32>
    %cst = arith.constant dense<0.000000e+00> : vector<1x256xf32>
    %1 = vector.multi_reduction <add>, %0, %cst [1] : vector<1x8x256xf32> to vector<1x256xf32>
    %cst_2 = arith.constant 8.000000e+00 : f32
    %2 = vector.broadcast %cst_2 : f32 to vector<1x256xf32>
    %3 = arith.divf %1, %2 : vector<1x256xf32>
    %cst_3 = arith.constant dense<0xFF800000> : vector<1x256xf32>
    %4 = vector.multi_reduction <maximumf>, %0, %cst_3 [1] : vector<1x8x256xf32> to vector<1x256xf32>
    %cst_4 = arith.constant 0.000000e+00 : f32
    %5 = vector.broadcast %cst_4 : f32 to vector<2x1x3x22xf32>
    %c0_5 = arith.constant 0 : index
    %c0_6 = arith.constant 0 : index
    %c0_7 = arith.constant 0 : index
    %c0_8 = arith.constant 0 : index
    %6 = vector.load %arg4[%c0_5, %c0_6, %c0_7, %c0_8] : memref<2x1x22x22xf32, #tpu.memory_space<vmem>>, vector<2x1x3x22xf32>
    tpu.vector_store %arg4[%c0_5, %c0_6, %c0_7, %c0_8], %5 {strides = array<i32>} : memref<2x1x22x22xf32, #tpu.memory_space<vmem>>, vector<2x1x3x22xf32>,
    %cst_9 = arith.constant 0.000000e+00 : f32
    %7 = vector.broadcast %cst_9 : f32 to vector<2x1x3x22xf32>
    %c0_10 = arith.constant 0 : index
    %c0_11 = arith.constant 0 : index
    %c19 = arith.constant 19 : index
    %c0_12 = arith.constant 0 : index
    %8 = vector.load %arg4[%c0_10, %c0_11, %c19, %c0_12] : memref<2x1x22x22xf32, #tpu.memory_space<vmem>>, vector<2x1x3x22xf32>
    tpu.vector_store %arg4[%c0_10, %c0_11, %c19, %c0_12], %7 {strides = array<i32>} : memref<2x1x22x22xf32, #tpu.memory_space<vmem>>, vector<2x1x3x22xf32>,
    %cst_13 = arith.constant 0.000000e+00 : f32
    %9 = vector.broadcast %cst_13 : f32 to vector<2x1x16x3xf32>
    %c0_14 = arith.constant 0 : index
    %c0_15 = arith.constant 0 : index
    %c3 = arith.constant 3 : index
    %c0_16 = arith.constant 0 : index
    %10 = vector.load %arg4[%c0_14, %c0_15, %c3, %c0_16] : memref<2x1x22x22xf32, #tpu.memory_space<vmem>>, vector<2x1x16x3xf32>
    tpu.vector_store %arg4[%c0_14, %c0_15, %c3, %c0_16], %9 {strides = array<i32>} : memref<2x1x22x22xf32, #tpu.memory_space<vmem>>, vector<2x1x16x3xf32>,
    %cst_17 = arith.constant 0.000000e+00 : f32
    %11 = vector.broadcast %cst_17 : f32 to vector<2x1x16x3xf32>
    %c0_18 = arith.constant 0 : index
    %c0_19 = arith.constant 0 : index
    %c3_20 = arith.constant 3 : index
    %c19_21 = arith.constant 19 : index
    %12 = vector.load %arg4[%c0_18, %c0_19, %c3_20, %c19_21] : memref<2x1x22x22xf32, #tpu.memory_space<vmem>>, vector<2x1x16x3xf32>
    tpu.vector_store %arg4[%c0_18, %c0_19, %c3_20, %c19_21], %11 {strides = array<i32>} : memref<2x1x22x22xf32, #tpu.memory_space<vmem>>, vector<2x1x16x3xf32>,
    %13 = vector.shape_cast %3 : vector<1x256xf32> to vector<1x16x16xf32>
    %c0_22 = arith.constant 0 : index
    %c0_23 = arith.constant 0 : index
    %c3_24 = arith.constant 3 : index
    %c3_25 = arith.constant 3 : index
    %14 = vector.load %arg4[%c0_22, %c0_23, %c3_24, %c3_25] : memref<2x1x22x22xf32, #tpu.memory_space<vmem>>, vector<1x1x16x16xf32>
    %15 = vector.shape_cast %14 : vector<1x1x16x16xf32> to vector<1x16x16xf32>
    %16 = vector.shape_cast %13 : vector<1x16x16xf32> to vector<1x1x16x16xf32>
    tpu.vector_store %arg4[%c0_22, %c0_23, %c3_24, %c3_25], %16 {strides = array<i32>} : memref<2x1x22x22xf32, #tpu.memory_space<vmem>>, vector<1x1x16x16xf32>,
    %17 = vector.shape_cast %4 : vector<1x256xf32> to vector<1x16x16xf32>
    %c1 = arith.constant 1 : index
    %c0_26 = arith.constant 0 : index
    %c3_27 = arith.constant 3 : index
    %c3_28 = arith.constant 3 : index
    %18 = vector.load %arg4[%c1, %c0_26, %c3_27, %c3_28] : memref<2x1x22x22xf32, #tpu.memory_space<vmem>>, vector<1x1x16x16xf32>
    %19 = vector.shape_cast %18 : vector<1x1x16x16xf32> to vector<1x16x16xf32>
    %20 = vector.shape_cast %17 : vector<1x16x16xf32> to vector<1x1x16x16xf32>
    tpu.vector_store %arg4[%c1, %c0_26, %c3_27, %c3_28], %20 {strides = array<i32>} : memref<2x1x22x22xf32, #tpu.memory_space<vmem>>, vector<1x1x16x16xf32>,
    %cst_29 = arith.constant 0.000000e+00 : f32
    %21 = vector.broadcast %cst_29 : f32 to vector<1x16x16xf32>
    %cst_30 = arith.constant 0.000000e+00 : f32
    %22 = vector.broadcast %cst_30 : f32 to vector<1x16x16xf32>
    %cst_31 = arith.constant 0.000000e+00 : f32
    %23 = vector.broadcast %cst_31 : f32 to vector<1x16x16xf32>
    %cst_32 = arith.constant 0.000000e+00 : f32
    %24 = vector.broadcast %cst_32 : f32 to vector<1x16x16xf32>
    %c0_33 = arith.constant 0 : index
    %c0_34 = arith.constant 0 : index
    %c0_35 = arith.constant 0 : index
    %c0_36 = arith.constant 0 : index
    %25 = vector.load %arg4[%c0_33, %c0_34, %c0_35, %c0_36] : memref<2x1x22x22xf32, #tpu.memory_space<vmem>>, vector<1x1x16x22xf32>
    %26 = vector.shape_cast %25 : vector<1x1x16x22xf32> to vector<1x16x22xf32>
    %27 = vector.extract_strided_slice %26 {offsets = [0, 0, 0], sizes = [1, 16, 16], strides = [1, 1, 1]} : vector<1x16x22xf32> to vector<1x16x16xf32>
    %c0_37 = arith.constant 0 : index
    %28 = memref.load %arg2[%c0_37] : memref<98xf32, #tpu.memory_space<smem>>
    %29 = vector.broadcast %28 : f32 to vector<1x16x16xf32>
    %30 = arith.mulf %27, %29 : vector<1x16x16xf32>
    %31 = arith.addf %21, %30 : vector<1x16x16xf32>
    %32 = vector.extract_strided_slice %26 {offsets = [0, 0, 1], sizes = [1, 16, 16], strides = [1, 1, 1]} : vector<1x16x22xf32> to vector<1x16x16xf32>
    %c2 = arith.constant 2 : index
    %33 = memref.load %arg2[%c2] : memref<98xf32, #tpu.memory_space<smem>>
    %34 = vector.broadcast %33 : f32 to vector<1x16x16xf32>
    %35 = arith.mulf %32, %34 : vector<1x16x16xf32>
    %36 = arith.addf %31, %35 : vector<1x16x16xf32>
    %37 = vector.extract_strided_slice %26 {offsets = [0, 0, 2], sizes = [1, 16, 16], strides = [1, 1, 1]} : vector<1x16x22xf32> to vector<1x16x16xf32>
    %c4 = arith.constant 4 : index
    %38 = memref.load %arg2[%c4] : memref<98xf32, #tpu.memory_space<smem>>
    %39 = vector.broadcast %38 : f32 to vector<1x16x16xf32>
    %40 = arith.mulf %37, %39 : vector<1x16x16xf32>
    %41 = arith.addf %36, %40 : vector<1x16x16xf32>
    %42 = vector.extract_strided_slice %26 {offsets = [0, 0, 3], sizes = [1, 16, 16], strides = [1, 1, 1]} : vector<1x16x22xf32> to vector<1x16x16xf32>
    %c6 = arith.constant 6 : index
    %43 = memref.load %arg2[%c6] : memref<98xf32, #tpu.memory_space<smem>>
    %44 = vector.broadcast %43 : f32 to vector<1x16x16xf32>
    %45 = arith.mulf %42, %44 : vector<1x16x16xf32>
    %46 = arith.addf %41, %45 : vector<1x16x16xf32>
    %47 = vector.extract_strided_slice %26 {offsets = [0, 0, 4], sizes = [1, 16, 16], strides = [1, 1, 1]} : vector<1x16x22xf32> to vector<1x16x16xf32>
    %c8 = arith.constant 8 : index
    %48 = memref.load %arg2[%c8] : memref<98xf32, #tpu.memory_space<smem>>
    %49 = vector.broadcast %48 : f32 to vector<1x16x16xf32>
    %50 = arith.mulf %47, %49 : vector<1x16x16xf32>
    %51 = arith.addf %46, %50 : vector<1x16x16xf32>
    %52 = vector.extract_strided_slice %26 {offsets = [0, 0, 5], sizes = [1, 16, 16], strides = [1, 1, 1]} : vector<1x16x22xf32> to vector<1x16x16xf32>
    %c10 = arith.constant 10 : index
    %53 = memref.load %arg2[%c10] : memref<98xf32, #tpu.memory_space<smem>>
    %54 = vector.broadcast %53 : f32 to vector<1x16x16xf32>
    %55 = arith.mulf %52, %54 : vector<1x16x16xf32>
    %56 = arith.addf %51, %55 : vector<1x16x16xf32>
    %57 = vector.extract_strided_slice %26 {offsets = [0, 0, 6], sizes = [1, 16, 16], strides = [1, 1, 1]} : vector<1x16x22xf32> to vector<1x16x16xf32>
    %c12 = arith.constant 12 : index
    %58 = memref.load %arg2[%c12] : memref<98xf32, #tpu.memory_space<smem>>
    %59 = vector.broadcast %58 : f32 to vector<1x16x16xf32>
    %60 = arith.mulf %57, %59 : vector<1x16x16xf32>
    %61 = arith.addf %56, %60 : vector<1x16x16xf32>
    %c1_38 = arith.constant 1 : index
    %c0_39 = arith.constant 0 : index
    %c0_40 = arith.constant 0 : index
    %c0_41 = arith.constant 0 : index
    %62 = vector.load %arg4[%c1_38, %c0_39, %c0_40, %c0_41] : memref<2x1x22x22xf32, #tpu.memory_space<vmem>>, vector<1x1x16x22xf32>
    %63 = vector.shape_cast %62 : vector<1x1x16x22xf32> to vector<1x16x22xf32>
    %64 = vector.extract_strided_slice %63 {offsets = [0, 0, 0], sizes = [1, 16, 16], strides = [1, 1, 1]} : vector<1x16x22xf32> to vector<1x16x16xf32>
    %c1_42 = arith.constant 1 : index
    %65 = memref.load %arg2[%c1_42] : memref<98xf32, #tpu.memory_space<smem>>
    %66 = vector.broadcast %65 : f32 to vector<1x16x16xf32>
    %67 = arith.mulf %64, %66 : vector<1x16x16xf32>
    %68 = arith.addf %22, %67 : vector<1x16x16xf32>
    %69 = vector.extract_strided_slice %63 {offsets = [0, 0, 1], sizes = [1, 16, 16], strides = [1, 1, 1]} : vector<1x16x22xf32> to vector<1x16x16xf32>
    %c3_43 = arith.constant 3 : index
    %70 = memref.load %arg2[%c3_43] : memref<98xf32, #tpu.memory_space<smem>>
    %71 = vector.broadcast %70 : f32 to vector<1x16x16xf32>
    %72 = arith.mulf %69, %71 : vector<1x16x16xf32>
    %73 = arith.addf %68, %72 : vector<1x16x16xf32>
    %74 = vector.extract_strided_slice %63 {offsets = [0, 0, 2], sizes = [1, 16, 16], strides = [1, 1, 1]} : vector<1x16x22xf32> to vector<1x16x16xf32>
    %c5 = arith.constant 5 : index
    %75 = memref.load %arg2[%c5] : memref<98xf32, #tpu.memory_space<smem>>
    %76 = vector.broadcast %75 : f32 to vector<1x16x16xf32>
    %77 = arith.mulf %74, %76 : vector<1x16x16xf32>
    %78 = arith.addf %73, %77 : vector<1x16x16xf32>
    %79 = vector.extract_strided_slice %63 {offsets = [0, 0, 3], sizes = [1, 16, 16], strides = [1, 1, 1]} : vector<1x16x22xf32> to vector<1x16x16xf32>
    %c7 = arith.constant 7 : index
    %80 = memref.load %arg2[%c7] : memref<98xf32, #tpu.memory_space<smem>>
    %81 = vector.broadcast %80 : f32 to vector<1x16x16xf32>
    %82 = arith.mulf %79, %81 : vector<1x16x16xf32>
    %83 = arith.addf %78, %82 : vector<1x16x16xf32>
    %84 = vector.extract_strided_slice %63 {offsets = [0, 0, 4], sizes = [1, 16, 16], strides = [1, 1, 1]} : vector<1x16x22xf32> to vector<1x16x16xf32>
    %c9 = arith.constant 9 : index
    %85 = memref.load %arg2[%c9] : memref<98xf32, #tpu.memory_space<smem>>
    %86 = vector.broadcast %85 : f32 to vector<1x16x16xf32>
    %87 = arith.mulf %84, %86 : vector<1x16x16xf32>
    %88 = arith.addf %83, %87 : vector<1x16x16xf32>
    %89 = vector.extract_strided_slice %63 {offsets = [0, 0, 5], sizes = [1, 16, 16], strides = [1, 1, 1]} : vector<1x16x22xf32> to vector<1x16x16xf32>
    %c11 = arith.constant 11 : index
    %90 = memref.load %arg2[%c11] : memref<98xf32, #tpu.memory_space<smem>>
    %91 = vector.broadcast %90 : f32 to vector<1x16x16xf32>
    %92 = arith.mulf %89, %91 : vector<1x16x16xf32>
    %93 = arith.addf %88, %92 : vector<1x16x16xf32>
    %94 = vector.extract_strided_slice %63 {offsets = [0, 0, 6], sizes = [1, 16, 16], strides = [1, 1, 1]} : vector<1x16x22xf32> to vector<1x16x16xf32>
    %c13 = arith.constant 13 : index
    %95 = memref.load %arg2[%c13] : memref<98xf32, #tpu.memory_space<smem>>
    %96 = vector.broadcast %95 : f32 to vector<1x16x16xf32>
    %97 = arith.mulf %94, %96 : vector<1x16x16xf32>
    %98 = arith.addf %93, %97 : vector<1x16x16xf32>
    %c0_44 = arith.constant 0 : index
    %c0_45 = arith.constant 0 : index
    %c1_46 = arith.constant 1 : index
    %c0_47 = arith.constant 0 : index
    %99 = vector.load %arg4[%c0_44, %c0_45, %c1_46, %c0_47] : memref<2x1x22x22xf32, #tpu.memory_space<vmem>>, vector<1x1x16x22xf32>
    %100 = vector.shape_cast %99 : vector<1x1x16x22xf32> to vector<1x16x22xf32>
    %101 = vector.extract_strided_slice %100 {offsets = [0, 0, 0], sizes = [1, 16, 16], strides = [1, 1, 1]} : vector<1x16x22xf32> to vector<1x16x16xf32>
    %c14 = arith.constant 14 : index
    %102 = memref.load %arg2[%c14] : memref<98xf32, #tpu.memory_space<smem>>
    %103 = vector.broadcast %102 : f32 to vector<1x16x16xf32>
    %104 = arith.mulf %101, %103 : vector<1x16x16xf32>
    %105 = arith.addf %23, %104 : vector<1x16x16xf32>
    %106 = vector.extract_strided_slice %100 {offsets = [0, 0, 1], sizes = [1, 16, 16], strides = [1, 1, 1]} : vector<1x16x22xf32> to vector<1x16x16xf32>
    %c16 = arith.constant 16 : index
    %107 = memref.load %arg2[%c16] : memref<98xf32, #tpu.memory_space<smem>>
    %108 = vector.broadcast %107 : f32 to vector<1x16x16xf32>
    %109 = arith.mulf %106, %108 : vector<1x16x16xf32>
    %110 = arith.addf %105, %109 : vector<1x16x16xf32>
    %111 = vector.extract_strided_slice %100 {offsets = [0, 0, 2], sizes = [1, 16, 16], strides = [1, 1, 1]} : vector<1x16x22xf32> to vector<1x16x16xf32>
    %c18 = arith.constant 18 : index
    %112 = memref.load %arg2[%c18] : memref<98xf32, #tpu.memory_space<smem>>
    %113 = vector.broadcast %112 : f32 to vector<1x16x16xf32>
    %114 = arith.mulf %111, %113 : vector<1x16x16xf32>
    %115 = arith.addf %110, %114 : vector<1x16x16xf32>
    %116 = vector.extract_strided_slice %100 {offsets = [0, 0, 3], sizes = [1, 16, 16], strides = [1, 1, 1]} : vector<1x16x22xf32> to vector<1x16x16xf32>
    %c20 = arith.constant 20 : index
    %117 = memref.load %arg2[%c20] : memref<98xf32, #tpu.memory_space<smem>>
    %118 = vector.broadcast %117 : f32 to vector<1x16x16xf32>
    %119 = arith.mulf %116, %118 : vector<1x16x16xf32>
    %120 = arith.addf %115, %119 : vector<1x16x16xf32>
    %121 = vector.extract_strided_slice %100 {offsets = [0, 0, 4], sizes = [1, 16, 16], strides = [1, 1, 1]} : vector<1x16x22xf32> to vector<1x16x16xf32>
    %c22 = arith.constant 22 : index
    %122 = memref.load %arg2[%c22] : memref<98xf32, #tpu.memory_space<smem>>
    %123 = vector.broadcast %122 : f32 to vector<1x16x16xf32>
    %124 = arith.mulf %121, %123 : vector<1x16x16xf32>
    %125 = arith.addf %120, %124 : vector<1x16x16xf32>
    %126 = vector.extract_strided_slice %100 {offsets = [0, 0, 5], sizes = [1, 16, 16], strides = [1, 1, 1]} : vector<1x16x22xf32> to vector<1x16x16xf32>
    %c24 = arith.constant 24 : index
    %127 = memref.load %arg2[%c24] : memref<98xf32, #tpu.memory_space<smem>>
    %128 = vector.broadcast %127 : f32 to vector<1x16x16xf32>
    %129 = arith.mulf %126, %128 : vector<1x16x16xf32>
    %130 = arith.addf %125, %129 : vector<1x16x16xf32>
    %131 = vector.extract_strided_slice %100 {offsets = [0, 0, 6], sizes = [1, 16, 16], strides = [1, 1, 1]} : vector<1x16x22xf32> to vector<1x16x16xf32>
    %c26 = arith.constant 26 : index
    %132 = memref.load %arg2[%c26] : memref<98xf32, #tpu.memory_space<smem>>
    %133 = vector.broadcast %132 : f32 to vector<1x16x16xf32>
    %134 = arith.mulf %131, %133 : vector<1x16x16xf32>
    %135 = arith.addf %130, %134 : vector<1x16x16xf32>
    %c1_48 = arith.constant 1 : index
    %c0_49 = arith.constant 0 : index
    %c1_50 = arith.constant 1 : index
    %c0_51 = arith.constant 0 : index
    %136 = vector.load %arg4[%c1_48, %c0_49, %c1_50, %c0_51] : memref<2x1x22x22xf32, #tpu.memory_space<vmem>>, vector<1x1x16x22xf32>
    %137 = vector.shape_cast %136 : vector<1x1x16x22xf32> to vector<1x16x22xf32>
    %138 = vector.extract_strided_slice %137 {offsets = [0, 0, 0], sizes = [1, 16, 16], strides = [1, 1, 1]} : vector<1x16x22xf32> to vector<1x16x16xf32>
    %c15 = arith.constant 15 : index
    %139 = memref.load %arg2[%c15] : memref<98xf32, #tpu.memory_space<smem>>
    %140 = vector.broadcast %139 : f32 to vector<1x16x16xf32>
    %141 = arith.mulf %138, %140 : vector<1x16x16xf32>
    %142 = arith.addf %24, %141 : vector<1x16x16xf32>
    %143 = vector.extract_strided_slice %137 {offsets = [0, 0, 1], sizes = [1, 16, 16], strides = [1, 1, 1]} : vector<1x16x22xf32> to vector<1x16x16xf32>
    %c17 = arith.constant 17 : index
    %144 = memref.load %arg2[%c17] : memref<98xf32, #tpu.memory_space<smem>>
    %145 = vector.broadcast %144 : f32 to vector<1x16x16xf32>
    %146 = arith.mulf %143, %145 : vector<1x16x16xf32>
    %147 = arith.addf %142, %146 : vector<1x16x16xf32>
    %148 = vector.extract_strided_slice %137 {offsets = [0, 0, 2], sizes = [1, 16, 16], strides = [1, 1, 1]} : vector<1x16x22xf32> to vector<1x16x16xf32>
    %c19_52 = arith.constant 19 : index
    %149 = memref.load %arg2[%c19_52] : memref<98xf32, #tpu.memory_space<smem>>
    %150 = vector.broadcast %149 : f32 to vector<1x16x16xf32>
    %151 = arith.mulf %148, %150 : vector<1x16x16xf32>
    %152 = arith.addf %147, %151 : vector<1x16x16xf32>
    %153 = vector.extract_strided_slice %137 {offsets = [0, 0, 3], sizes = [1, 16, 16], strides = [1, 1, 1]} : vector<1x16x22xf32> to vector<1x16x16xf32>
    %c21 = arith.constant 21 : index
    %154 = memref.load %arg2[%c21] : memref<98xf32, #tpu.memory_space<smem>>
    %155 = vector.broadcast %154 : f32 to vector<1x16x16xf32>
    %156 = arith.mulf %153, %155 : vector<1x16x16xf32>
    %157 = arith.addf %152, %156 : vector<1x16x16xf32>
    %158 = vector.extract_strided_slice %137 {offsets = [0, 0, 4], sizes = [1, 16, 16], strides = [1, 1, 1]} : vector<1x16x22xf32> to vector<1x16x16xf32>
    %c23 = arith.constant 23 : index
    %159 = memref.load %arg2[%c23] : memref<98xf32, #tpu.memory_space<smem>>
    %160 = vector.broadcast %159 : f32 to vector<1x16x16xf32>
    %161 = arith.mulf %158, %160 : vector<1x16x16xf32>
    %162 = arith.addf %157, %161 : vector<1x16x16xf32>
    %163 = vector.extract_strided_slice %137 {offsets = [0, 0, 5], sizes = [1, 16, 16], strides = [1, 1, 1]} : vector<1x16x22xf32> to vector<1x16x16xf32>
    %c25 = arith.constant 25 : index
    %164 = memref.load %arg2[%c25] : memref<98xf32, #tpu.memory_space<smem>>
    %165 = vector.broadcast %164 : f32 to vector<1x16x16xf32>
    %166 = arith.mulf %163, %165 : vector<1x16x16xf32>
    %167 = arith.addf %162, %166 : vector<1x16x16xf32>
    %168 = vector.extract_strided_slice %137 {offsets = [0, 0, 6], sizes = [1, 16, 16], strides = [1, 1, 1]} : vector<1x16x22xf32> to vector<1x16x16xf32>
    %c27 = arith.constant 27 : index
    %169 = memref.load %arg2[%c27] : memref<98xf32, #tpu.memory_space<smem>>
    %170 = vector.broadcast %169 : f32 to vector<1x16x16xf32>
    %171 = arith.mulf %168, %170 : vector<1x16x16xf32>
    %172 = arith.addf %167, %171 : vector<1x16x16xf32>
    %c0_53 = arith.constant 0 : index
    %c0_54 = arith.constant 0 : index
    %c2_55 = arith.constant 2 : index
    %c0_56 = arith.constant 0 : index
    %173 = vector.load %arg4[%c0_53, %c0_54, %c2_55, %c0_56] : memref<2x1x22x22xf32, #tpu.memory_space<vmem>>, vector<1x1x16x22xf32>
    %174 = vector.shape_cast %173 : vector<1x1x16x22xf32> to vector<1x16x22xf32>
    %175 = vector.extract_strided_slice %174 {offsets = [0, 0, 0], sizes = [1, 16, 16], strides = [1, 1, 1]} : vector<1x16x22xf32> to vector<1x16x16xf32>
    %c28 = arith.constant 28 : index
    %176 = memref.load %arg2[%c28] : memref<98xf32, #tpu.memory_space<smem>>
    %177 = vector.broadcast %176 : f32 to vector<1x16x16xf32>
    %178 = arith.mulf %175, %177 : vector<1x16x16xf32>
    %179 = arith.addf %61, %178 : vector<1x16x16xf32>
    %180 = vector.extract_strided_slice %174 {offsets = [0, 0, 1], sizes = [1, 16, 16], strides = [1, 1, 1]} : vector<1x16x22xf32> to vector<1x16x16xf32>
    %c30 = arith.constant 30 : index
    %181 = memref.load %arg2[%c30] : memref<98xf32, #tpu.memory_space<smem>>
    %182 = vector.broadcast %181 : f32 to vector<1x16x16xf32>
    %183 = arith.mulf %180, %182 : vector<1x16x16xf32>
    %184 = arith.addf %179, %183 : vector<1x16x16xf32>
    %185 = vector.extract_strided_slice %174 {offsets = [0, 0, 2], sizes = [1, 16, 16], strides = [1, 1, 1]} : vector<1x16x22xf32> to vector<1x16x16xf32>
    %c32 = arith.constant 32 : index
    %186 = memref.load %arg2[%c32] : memref<98xf32, #tpu.memory_space<smem>>
    %187 = vector.broadcast %186 : f32 to vector<1x16x16xf32>
    %188 = arith.mulf %185, %187 : vector<1x16x16xf32>
    %189 = arith.addf %184, %188 : vector<1x16x16xf32>
    %190 = vector.extract_strided_slice %174 {offsets = [0, 0, 3], sizes = [1, 16, 16], strides = [1, 1, 1]} : vector<1x16x22xf32> to vector<1x16x16xf32>
    %c34 = arith.constant 34 : index
    %191 = memref.load %arg2[%c34] : memref<98xf32, #tpu.memory_space<smem>>
    %192 = vector.broadcast %191 : f32 to vector<1x16x16xf32>
    %193 = arith.mulf %190, %192 : vector<1x16x16xf32>
    %194 = arith.addf %189, %193 : vector<1x16x16xf32>
    %195 = vector.extract_strided_slice %174 {offsets = [0, 0, 4], sizes = [1, 16, 16], strides = [1, 1, 1]} : vector<1x16x22xf32> to vector<1x16x16xf32>
    %c36 = arith.constant 36 : index
    %196 = memref.load %arg2[%c36] : memref<98xf32, #tpu.memory_space<smem>>
    %197 = vector.broadcast %196 : f32 to vector<1x16x16xf32>
    %198 = arith.mulf %195, %197 : vector<1x16x16xf32>
    %199 = arith.addf %194, %198 : vector<1x16x16xf32>
    %200 = vector.extract_strided_slice %174 {offsets = [0, 0, 5], sizes = [1, 16, 16], strides = [1, 1, 1]} : vector<1x16x22xf32> to vector<1x16x16xf32>
    %c38 = arith.constant 38 : index
    %201 = memref.load %arg2[%c38] : memref<98xf32, #tpu.memory_space<smem>>
    %202 = vector.broadcast %201 : f32 to vector<1x16x16xf32>
    %203 = arith.mulf %200, %202 : vector<1x16x16xf32>
    %204 = arith.addf %199, %203 : vector<1x16x16xf32>
    %205 = vector.extract_strided_slice %174 {offsets = [0, 0, 6], sizes = [1, 16, 16], strides = [1, 1, 1]} : vector<1x16x22xf32> to vector<1x16x16xf32>
    %c40 = arith.constant 40 : index
    %206 = memref.load %arg2[%c40] : memref<98xf32, #tpu.memory_space<smem>>
    %207 = vector.broadcast %206 : f32 to vector<1x16x16xf32>
    %208 = arith.mulf %205, %207 : vector<1x16x16xf32>
    %209 = arith.addf %204, %208 : vector<1x16x16xf32>
    %c1_57 = arith.constant 1 : index
    %c0_58 = arith.constant 0 : index
    %c2_59 = arith.constant 2 : index
    %c0_60 = arith.constant 0 : index
    %210 = vector.load %arg4[%c1_57, %c0_58, %c2_59, %c0_60] : memref<2x1x22x22xf32, #tpu.memory_space<vmem>>, vector<1x1x16x22xf32>
    %211 = vector.shape_cast %210 : vector<1x1x16x22xf32> to vector<1x16x22xf32>
    %212 = vector.extract_strided_slice %211 {offsets = [0, 0, 0], sizes = [1, 16, 16], strides = [1, 1, 1]} : vector<1x16x22xf32> to vector<1x16x16xf32>
    %c29 = arith.constant 29 : index
    %213 = memref.load %arg2[%c29] : memref<98xf32, #tpu.memory_space<smem>>
    %214 = vector.broadcast %213 : f32 to vector<1x16x16xf32>
    %215 = arith.mulf %212, %214 : vector<1x16x16xf32>
    %216 = arith.addf %98, %215 : vector<1x16x16xf32>
    %217 = vector.extract_strided_slice %211 {offsets = [0, 0, 1], sizes = [1, 16, 16], strides = [1, 1, 1]} : vector<1x16x22xf32> to vector<1x16x16xf32>
    %c31 = arith.constant 31 : index
    %218 = memref.load %arg2[%c31] : memref<98xf32, #tpu.memory_space<smem>>
    %219 = vector.broadcast %218 : f32 to vector<1x16x16xf32>
    %220 = arith.mulf %217, %219 : vector<1x16x16xf32>
    %221 = arith.addf %216, %220 : vector<1x16x16xf32>
    %222 = vector.extract_strided_slice %211 {offsets = [0, 0, 2], sizes = [1, 16, 16], strides = [1, 1, 1]} : vector<1x16x22xf32> to vector<1x16x16xf32>
    %c33 = arith.constant 33 : index
    %223 = memref.load %arg2[%c33] : memref<98xf32, #tpu.memory_space<smem>>
    %224 = vector.broadcast %223 : f32 to vector<1x16x16xf32>
    %225 = arith.mulf %222, %224 : vector<1x16x16xf32>
    %226 = arith.addf %221, %225 : vector<1x16x16xf32>
    %227 = vector.extract_strided_slice %211 {offsets = [0, 0, 3], sizes = [1, 16, 16], strides = [1, 1, 1]} : vector<1x16x22xf32> to vector<1x16x16xf32>
    %c35 = arith.constant 35 : index
    %228 = memref.load %arg2[%c35] : memref<98xf32, #tpu.memory_space<smem>>
    %229 = vector.broadcast %228 : f32 to vector<1x16x16xf32>
    %230 = arith.mulf %227, %229 : vector<1x16x16xf32>
    %231 = arith.addf %226, %230 : vector<1x16x16xf32>
    %232 = vector.extract_strided_slice %211 {offsets = [0, 0, 4], sizes = [1, 16, 16], strides = [1, 1, 1]} : vector<1x16x22xf32> to vector<1x16x16xf32>
    %c37 = arith.constant 37 : index
    %233 = memref.load %arg2[%c37] : memref<98xf32, #tpu.memory_space<smem>>
    %234 = vector.broadcast %233 : f32 to vector<1x16x16xf32>
    %235 = arith.mulf %232, %234 : vector<1x16x16xf32>
    %236 = arith.addf %231, %235 : vector<1x16x16xf32>
    %237 = vector.extract_strided_slice %211 {offsets = [0, 0, 5], sizes = [1, 16, 16], strides = [1, 1, 1]} : vector<1x16x22xf32> to vector<1x16x16xf32>
    %c39 = arith.constant 39 : index
    %238 = memref.load %arg2[%c39] : memref<98xf32, #tpu.memory_space<smem>>
    %239 = vector.broadcast %238 : f32 to vector<1x16x16xf32>
    %240 = arith.mulf %237, %239 : vector<1x16x16xf32>
    %241 = arith.addf %236, %240 : vector<1x16x16xf32>
    %242 = vector.extract_strided_slice %211 {offsets = [0, 0, 6], sizes = [1, 16, 16], strides = [1, 1, 1]} : vector<1x16x22xf32> to vector<1x16x16xf32>
    %c41 = arith.constant 41 : index
    %243 = memref.load %arg2[%c41] : memref<98xf32, #tpu.memory_space<smem>>
    %244 = vector.broadcast %243 : f32 to vector<1x16x16xf32>
    %245 = arith.mulf %242, %244 : vector<1x16x16xf32>
    %246 = arith.addf %241, %245 : vector<1x16x16xf32>
    %c0_61 = arith.constant 0 : index
    %c0_62 = arith.constant 0 : index
    %c3_63 = arith.constant 3 : index
    %c0_64 = arith.constant 0 : index
    %247 = vector.load %arg4[%c0_61, %c0_62, %c3_63, %c0_64] : memref<2x1x22x22xf32, #tpu.memory_space<vmem>>, vector<1x1x16x22xf32>
    %248 = vector.shape_cast %247 : vector<1x1x16x22xf32> to vector<1x16x22xf32>
    %249 = vector.extract_strided_slice %248 {offsets = [0, 0, 0], sizes = [1, 16, 16], strides = [1, 1, 1]} : vector<1x16x22xf32> to vector<1x16x16xf32>
    %c42 = arith.constant 42 : index
    %250 = memref.load %arg2[%c42] : memref<98xf32, #tpu.memory_space<smem>>
    %251 = vector.broadcast %250 : f32 to vector<1x16x16xf32>
    %252 = arith.mulf %249, %251 : vector<1x16x16xf32>
    %253 = arith.addf %135, %252 : vector<1x16x16xf32>
    %254 = vector.extract_strided_slice %248 {offsets = [0, 0, 1], sizes = [1, 16, 16], strides = [1, 1, 1]} : vector<1x16x22xf32> to vector<1x16x16xf32>
    %c44 = arith.constant 44 : index
    %255 = memref.load %arg2[%c44] : memref<98xf32, #tpu.memory_space<smem>>
    %256 = vector.broadcast %255 : f32 to vector<1x16x16xf32>
    %257 = arith.mulf %254, %256 : vector<1x16x16xf32>
    %258 = arith.addf %253, %257 : vector<1x16x16xf32>
    %259 = vector.extract_strided_slice %248 {offsets = [0, 0, 2], sizes = [1, 16, 16], strides = [1, 1, 1]} : vector<1x16x22xf32> to vector<1x16x16xf32>
    %c46 = arith.constant 46 : index
    %260 = memref.load %arg2[%c46] : memref<98xf32, #tpu.memory_space<smem>>
    %261 = vector.broadcast %260 : f32 to vector<1x16x16xf32>
    %262 = arith.mulf %259, %261 : vector<1x16x16xf32>
    %263 = arith.addf %258, %262 : vector<1x16x16xf32>
    %264 = vector.extract_strided_slice %248 {offsets = [0, 0, 3], sizes = [1, 16, 16], strides = [1, 1, 1]} : vector<1x16x22xf32> to vector<1x16x16xf32>
    %c48 = arith.constant 48 : index
    %265 = memref.load %arg2[%c48] : memref<98xf32, #tpu.memory_space<smem>>
    %266 = vector.broadcast %265 : f32 to vector<1x16x16xf32>
    %267 = arith.mulf %264, %266 : vector<1x16x16xf32>
    %268 = arith.addf %263, %267 : vector<1x16x16xf32>
    %269 = vector.extract_strided_slice %248 {offsets = [0, 0, 4], sizes = [1, 16, 16], strides = [1, 1, 1]} : vector<1x16x22xf32> to vector<1x16x16xf32>
    %c50 = arith.constant 50 : index
    %270 = memref.load %arg2[%c50] : memref<98xf32, #tpu.memory_space<smem>>
    %271 = vector.broadcast %270 : f32 to vector<1x16x16xf32>
    %272 = arith.mulf %269, %271 : vector<1x16x16xf32>
    %273 = arith.addf %268, %272 : vector<1x16x16xf32>
    %274 = vector.extract_strided_slice %248 {offsets = [0, 0, 5], sizes = [1, 16, 16], strides = [1, 1, 1]} : vector<1x16x22xf32> to vector<1x16x16xf32>
    %c52 = arith.constant 52 : index
    %275 = memref.load %arg2[%c52] : memref<98xf32, #tpu.memory_space<smem>>
    %276 = vector.broadcast %275 : f32 to vector<1x16x16xf32>
    %277 = arith.mulf %274, %276 : vector<1x16x16xf32>
    %278 = arith.addf %273, %277 : vector<1x16x16xf32>
    %279 = vector.extract_strided_slice %248 {offsets = [0, 0, 6], sizes = [1, 16, 16], strides = [1, 1, 1]} : vector<1x16x22xf32> to vector<1x16x16xf32>
    %c54 = arith.constant 54 : index
    %280 = memref.load %arg2[%c54] : memref<98xf32, #tpu.memory_space<smem>>
    %281 = vector.broadcast %280 : f32 to vector<1x16x16xf32>
    %282 = arith.mulf %279, %281 : vector<1x16x16xf32>
    %283 = arith.addf %278, %282 : vector<1x16x16xf32>
    %c1_65 = arith.constant 1 : index
    %c0_66 = arith.constant 0 : index
    %c3_67 = arith.constant 3 : index
    %c0_68 = arith.constant 0 : index
    %284 = vector.load %arg4[%c1_65, %c0_66, %c3_67, %c0_68] : memref<2x1x22x22xf32, #tpu.memory_space<vmem>>, vector<1x1x16x22xf32>
    %285 = vector.shape_cast %284 : vector<1x1x16x22xf32> to vector<1x16x22xf32>
    %286 = vector.extract_strided_slice %285 {offsets = [0, 0, 0], sizes = [1, 16, 16], strides = [1, 1, 1]} : vector<1x16x22xf32> to vector<1x16x16xf32>
    %c43 = arith.constant 43 : index
    %287 = memref.load %arg2[%c43] : memref<98xf32, #tpu.memory_space<smem>>
    %288 = vector.broadcast %287 : f32 to vector<1x16x16xf32>
    %289 = arith.mulf %286, %288 : vector<1x16x16xf32>
    %290 = arith.addf %172, %289 : vector<1x16x16xf32>
    %291 = vector.extract_strided_slice %285 {offsets = [0, 0, 1], sizes = [1, 16, 16], strides = [1, 1, 1]} : vector<1x16x22xf32> to vector<1x16x16xf32>
    %c45 = arith.constant 45 : index
    %292 = memref.load %arg2[%c45] : memref<98xf32, #tpu.memory_space<smem>>
    %293 = vector.broadcast %292 : f32 to vector<1x16x16xf32>
    %294 = arith.mulf %291, %293 : vector<1x16x16xf32>
    %295 = arith.addf %290, %294 : vector<1x16x16xf32>
    %296 = vector.extract_strided_slice %285 {offsets = [0, 0, 2], sizes = [1, 16, 16], strides = [1, 1, 1]} : vector<1x16x22xf32> to vector<1x16x16xf32>
    %c47 = arith.constant 47 : index
    %297 = memref.load %arg2[%c47] : memref<98xf32, #tpu.memory_space<smem>>
    %298 = vector.broadcast %297 : f32 to vector<1x16x16xf32>
    %299 = arith.mulf %296, %298 : vector<1x16x16xf32>
    %300 = arith.addf %295, %299 : vector<1x16x16xf32>
    %301 = vector.extract_strided_slice %285 {offsets = [0, 0, 3], sizes = [1, 16, 16], strides = [1, 1, 1]} : vector<1x16x22xf32> to vector<1x16x16xf32>
    %c49 = arith.constant 49 : index
    %302 = memref.load %arg2[%c49] : memref<98xf32, #tpu.memory_space<smem>>
    %303 = vector.broadcast %302 : f32 to vector<1x16x16xf32>
    %304 = arith.mulf %301, %303 : vector<1x16x16xf32>
    %305 = arith.addf %300, %304 : vector<1x16x16xf32>
    %306 = vector.extract_strided_slice %285 {offsets = [0, 0, 4], sizes = [1, 16, 16], strides = [1, 1, 1]} : vector<1x16x22xf32> to vector<1x16x16xf32>
    %c51 = arith.constant 51 : index
    %307 = memref.load %arg2[%c51] : memref<98xf32, #tpu.memory_space<smem>>
    %308 = vector.broadcast %307 : f32 to vector<1x16x16xf32>
    %309 = arith.mulf %306, %308 : vector<1x16x16xf32>
    %310 = arith.addf %305, %309 : vector<1x16x16xf32>
    %311 = vector.extract_strided_slice %285 {offsets = [0, 0, 5], sizes = [1, 16, 16], strides = [1, 1, 1]} : vector<1x16x22xf32> to vector<1x16x16xf32>
    %c53 = arith.constant 53 : index
    %312 = memref.load %arg2[%c53] : memref<98xf32, #tpu.memory_space<smem>>
    %313 = vector.broadcast %312 : f32 to vector<1x16x16xf32>
    %314 = arith.mulf %311, %313 : vector<1x16x16xf32>
    %315 = arith.addf %310, %314 : vector<1x16x16xf32>
    %316 = vector.extract_strided_slice %285 {offsets = [0, 0, 6], sizes = [1, 16, 16], strides = [1, 1, 1]} : vector<1x16x22xf32> to vector<1x16x16xf32>
    %c55 = arith.constant 55 : index
    %317 = memref.load %arg2[%c55] : memref<98xf32, #tpu.memory_space<smem>>
    %318 = vector.broadcast %317 : f32 to vector<1x16x16xf32>
    %319 = arith.mulf %316, %318 : vector<1x16x16xf32>
    %320 = arith.addf %315, %319 : vector<1x16x16xf32>
    %c0_69 = arith.constant 0 : index
    %c0_70 = arith.constant 0 : index
    %c4_71 = arith.constant 4 : index
    %c0_72 = arith.constant 0 : index
    %321 = vector.load %arg4[%c0_69, %c0_70, %c4_71, %c0_72] : memref<2x1x22x22xf32, #tpu.memory_space<vmem>>, vector<1x1x16x22xf32>
    %322 = vector.shape_cast %321 : vector<1x1x16x22xf32> to vector<1x16x22xf32>
    %323 = vector.extract_strided_slice %322 {offsets = [0, 0, 0], sizes = [1, 16, 16], strides = [1, 1, 1]} : vector<1x16x22xf32> to vector<1x16x16xf32>
    %c56 = arith.constant 56 : index
    %324 = memref.load %arg2[%c56] : memref<98xf32, #tpu.memory_space<smem>>
    %325 = vector.broadcast %324 : f32 to vector<1x16x16xf32>
    %326 = arith.mulf %323, %325 : vector<1x16x16xf32>
    %327 = arith.addf %209, %326 : vector<1x16x16xf32>
    %328 = vector.extract_strided_slice %322 {offsets = [0, 0, 1], sizes = [1, 16, 16], strides = [1, 1, 1]} : vector<1x16x22xf32> to vector<1x16x16xf32>
    %c58 = arith.constant 58 : index
    %329 = memref.load %arg2[%c58] : memref<98xf32, #tpu.memory_space<smem>>
    %330 = vector.broadcast %329 : f32 to vector<1x16x16xf32>
    %331 = arith.mulf %328, %330 : vector<1x16x16xf32>
    %332 = arith.addf %327, %331 : vector<1x16x16xf32>
    %333 = vector.extract_strided_slice %322 {offsets = [0, 0, 2], sizes = [1, 16, 16], strides = [1, 1, 1]} : vector<1x16x22xf32> to vector<1x16x16xf32>
    %c60 = arith.constant 60 : index
    %334 = memref.load %arg2[%c60] : memref<98xf32, #tpu.memory_space<smem>>
    %335 = vector.broadcast %334 : f32 to vector<1x16x16xf32>
    %336 = arith.mulf %333, %335 : vector<1x16x16xf32>
    %337 = arith.addf %332, %336 : vector<1x16x16xf32>
    %338 = vector.extract_strided_slice %322 {offsets = [0, 0, 3], sizes = [1, 16, 16], strides = [1, 1, 1]} : vector<1x16x22xf32> to vector<1x16x16xf32>
    %c62 = arith.constant 62 : index
    %339 = memref.load %arg2[%c62] : memref<98xf32, #tpu.memory_space<smem>>
    %340 = vector.broadcast %339 : f32 to vector<1x16x16xf32>
    %341 = arith.mulf %338, %340 : vector<1x16x16xf32>
    %342 = arith.addf %337, %341 : vector<1x16x16xf32>
    %343 = vector.extract_strided_slice %322 {offsets = [0, 0, 4], sizes = [1, 16, 16], strides = [1, 1, 1]} : vector<1x16x22xf32> to vector<1x16x16xf32>
    %c64 = arith.constant 64 : index
    %344 = memref.load %arg2[%c64] : memref<98xf32, #tpu.memory_space<smem>>
    %345 = vector.broadcast %344 : f32 to vector<1x16x16xf32>
    %346 = arith.mulf %343, %345 : vector<1x16x16xf32>
    %347 = arith.addf %342, %346 : vector<1x16x16xf32>
    %348 = vector.extract_strided_slice %322 {offsets = [0, 0, 5], sizes = [1, 16, 16], strides = [1, 1, 1]} : vector<1x16x22xf32> to vector<1x16x16xf32>
    %c66 = arith.constant 66 : index
    %349 = memref.load %arg2[%c66] : memref<98xf32, #tpu.memory_space<smem>>
    %350 = vector.broadcast %349 : f32 to vector<1x16x16xf32>
    %351 = arith.mulf %348, %350 : vector<1x16x16xf32>
    %352 = arith.addf %347, %351 : vector<1x16x16xf32>
    %353 = vector.extract_strided_slice %322 {offsets = [0, 0, 6], sizes = [1, 16, 16], strides = [1, 1, 1]} : vector<1x16x22xf32> to vector<1x16x16xf32>
    %c68 = arith.constant 68 : index
    %354 = memref.load %arg2[%c68] : memref<98xf32, #tpu.memory_space<smem>>
    %355 = vector.broadcast %354 : f32 to vector<1x16x16xf32>
    %356 = arith.mulf %353, %355 : vector<1x16x16xf32>
    %357 = arith.addf %352, %356 : vector<1x16x16xf32>
    %c1_73 = arith.constant 1 : index
    %c0_74 = arith.constant 0 : index
    %c4_75 = arith.constant 4 : index
    %c0_76 = arith.constant 0 : index
    %358 = vector.load %arg4[%c1_73, %c0_74, %c4_75, %c0_76] : memref<2x1x22x22xf32, #tpu.memory_space<vmem>>, vector<1x1x16x22xf32>
    %359 = vector.shape_cast %358 : vector<1x1x16x22xf32> to vector<1x16x22xf32>
    %360 = vector.extract_strided_slice %359 {offsets = [0, 0, 0], sizes = [1, 16, 16], strides = [1, 1, 1]} : vector<1x16x22xf32> to vector<1x16x16xf32>
    %c57 = arith.constant 57 : index
    %361 = memref.load %arg2[%c57] : memref<98xf32, #tpu.memory_space<smem>>
    %362 = vector.broadcast %361 : f32 to vector<1x16x16xf32>
    %363 = arith.mulf %360, %362 : vector<1x16x16xf32>
    %364 = arith.addf %246, %363 : vector<1x16x16xf32>
    %365 = vector.extract_strided_slice %359 {offsets = [0, 0, 1], sizes = [1, 16, 16], strides = [1, 1, 1]} : vector<1x16x22xf32> to vector<1x16x16xf32>
    %c59 = arith.constant 59 : index
    %366 = memref.load %arg2[%c59] : memref<98xf32, #tpu.memory_space<smem>>
    %367 = vector.broadcast %366 : f32 to vector<1x16x16xf32>
    %368 = arith.mulf %365, %367 : vector<1x16x16xf32>
    %369 = arith.addf %364, %368 : vector<1x16x16xf32>
    %370 = vector.extract_strided_slice %359 {offsets = [0, 0, 2], sizes = [1, 16, 16], strides = [1, 1, 1]} : vector<1x16x22xf32> to vector<1x16x16xf32>
    %c61 = arith.constant 61 : index
    %371 = memref.load %arg2[%c61] : memref<98xf32, #tpu.memory_space<smem>>
    %372 = vector.broadcast %371 : f32 to vector<1x16x16xf32>
    %373 = arith.mulf %370, %372 : vector<1x16x16xf32>
    %374 = arith.addf %369, %373 : vector<1x16x16xf32>
    %375 = vector.extract_strided_slice %359 {offsets = [0, 0, 3], sizes = [1, 16, 16], strides = [1, 1, 1]} : vector<1x16x22xf32> to vector<1x16x16xf32>
    %c63 = arith.constant 63 : index
    %376 = memref.load %arg2[%c63] : memref<98xf32, #tpu.memory_space<smem>>
    %377 = vector.broadcast %376 : f32 to vector<1x16x16xf32>
    %378 = arith.mulf %375, %377 : vector<1x16x16xf32>
    %379 = arith.addf %374, %378 : vector<1x16x16xf32>
    %380 = vector.extract_strided_slice %359 {offsets = [0, 0, 4], sizes = [1, 16, 16], strides = [1, 1, 1]} : vector<1x16x22xf32> to vector<1x16x16xf32>
    %c65 = arith.constant 65 : index
    %381 = memref.load %arg2[%c65] : memref<98xf32, #tpu.memory_space<smem>>
    %382 = vector.broadcast %381 : f32 to vector<1x16x16xf32>
    %383 = arith.mulf %380, %382 : vector<1x16x16xf32>
    %384 = arith.addf %379, %383 : vector<1x16x16xf32>
    %385 = vector.extract_strided_slice %359 {offsets = [0, 0, 5], sizes = [1, 16, 16], strides = [1, 1, 1]} : vector<1x16x22xf32> to vector<1x16x16xf32>
    %c67 = arith.constant 67 : index
    %386 = memref.load %arg2[%c67] : memref<98xf32, #tpu.memory_space<smem>>
    %387 = vector.broadcast %386 : f32 to vector<1x16x16xf32>
    %388 = arith.mulf %385, %387 : vector<1x16x16xf32>
    %389 = arith.addf %384, %388 : vector<1x16x16xf32>
    %390 = vector.extract_strided_slice %359 {offsets = [0, 0, 6], sizes = [1, 16, 16], strides = [1, 1, 1]} : vector<1x16x22xf32> to vector<1x16x16xf32>
    %c69 = arith.constant 69 : index
    %391 = memref.load %arg2[%c69] : memref<98xf32, #tpu.memory_space<smem>>
    %392 = vector.broadcast %391 : f32 to vector<1x16x16xf32>
    %393 = arith.mulf %390, %392 : vector<1x16x16xf32>
    %394 = arith.addf %389, %393 : vector<1x16x16xf32>
    %c0_77 = arith.constant 0 : index
    %c0_78 = arith.constant 0 : index
    %c5_79 = arith.constant 5 : index
    %c0_80 = arith.constant 0 : index
    %395 = vector.load %arg4[%c0_77, %c0_78, %c5_79, %c0_80] : memref<2x1x22x22xf32, #tpu.memory_space<vmem>>, vector<1x1x16x22xf32>
    %396 = vector.shape_cast %395 : vector<1x1x16x22xf32> to vector<1x16x22xf32>
    %397 = vector.extract_strided_slice %396 {offsets = [0, 0, 0], sizes = [1, 16, 16], strides = [1, 1, 1]} : vector<1x16x22xf32> to vector<1x16x16xf32>
    %c70 = arith.constant 70 : index
    %398 = memref.load %arg2[%c70] : memref<98xf32, #tpu.memory_space<smem>>
    %399 = vector.broadcast %398 : f32 to vector<1x16x16xf32>
    %400 = arith.mulf %397, %399 : vector<1x16x16xf32>
    %401 = arith.addf %283, %400 : vector<1x16x16xf32>
    %402 = vector.extract_strided_slice %396 {offsets = [0, 0, 1], sizes = [1, 16, 16], strides = [1, 1, 1]} : vector<1x16x22xf32> to vector<1x16x16xf32>
    %c72 = arith.constant 72 : index
    %403 = memref.load %arg2[%c72] : memref<98xf32, #tpu.memory_space<smem>>
    %404 = vector.broadcast %403 : f32 to vector<1x16x16xf32>
    %405 = arith.mulf %402, %404 : vector<1x16x16xf32>
    %406 = arith.addf %401, %405 : vector<1x16x16xf32>
    %407 = vector.extract_strided_slice %396 {offsets = [0, 0, 2], sizes = [1, 16, 16], strides = [1, 1, 1]} : vector<1x16x22xf32> to vector<1x16x16xf32>
    %c74 = arith.constant 74 : index
    %408 = memref.load %arg2[%c74] : memref<98xf32, #tpu.memory_space<smem>>
    %409 = vector.broadcast %408 : f32 to vector<1x16x16xf32>
    %410 = arith.mulf %407, %409 : vector<1x16x16xf32>
    %411 = arith.addf %406, %410 : vector<1x16x16xf32>
    %412 = vector.extract_strided_slice %396 {offsets = [0, 0, 3], sizes = [1, 16, 16], strides = [1, 1, 1]} : vector<1x16x22xf32> to vector<1x16x16xf32>
    %c76 = arith.constant 76 : index
    %413 = memref.load %arg2[%c76] : memref<98xf32, #tpu.memory_space<smem>>
    %414 = vector.broadcast %413 : f32 to vector<1x16x16xf32>
    %415 = arith.mulf %412, %414 : vector<1x16x16xf32>
    %416 = arith.addf %411, %415 : vector<1x16x16xf32>
    %417 = vector.extract_strided_slice %396 {offsets = [0, 0, 4], sizes = [1, 16, 16], strides = [1, 1, 1]} : vector<1x16x22xf32> to vector<1x16x16xf32>
    %c78 = arith.constant 78 : index
    %418 = memref.load %arg2[%c78] : memref<98xf32, #tpu.memory_space<smem>>
    %419 = vector.broadcast %418 : f32 to vector<1x16x16xf32>
    %420 = arith.mulf %417, %419 : vector<1x16x16xf32>
    %421 = arith.addf %416, %420 : vector<1x16x16xf32>
    %422 = vector.extract_strided_slice %396 {offsets = [0, 0, 5], sizes = [1, 16, 16], strides = [1, 1, 1]} : vector<1x16x22xf32> to vector<1x16x16xf32>
    %c80 = arith.constant 80 : index
    %423 = memref.load %arg2[%c80] : memref<98xf32, #tpu.memory_space<smem>>
    %424 = vector.broadcast %423 : f32 to vector<1x16x16xf32>
    %425 = arith.mulf %422, %424 : vector<1x16x16xf32>
    %426 = arith.addf %421, %425 : vector<1x16x16xf32>
    %427 = vector.extract_strided_slice %396 {offsets = [0, 0, 6], sizes = [1, 16, 16], strides = [1, 1, 1]} : vector<1x16x22xf32> to vector<1x16x16xf32>
    %c82 = arith.constant 82 : index
    %428 = memref.load %arg2[%c82] : memref<98xf32, #tpu.memory_space<smem>>
    %429 = vector.broadcast %428 : f32 to vector<1x16x16xf32>
    %430 = arith.mulf %427, %429 : vector<1x16x16xf32>
    %431 = arith.addf %426, %430 : vector<1x16x16xf32>
    %c1_81 = arith.constant 1 : index
    %c0_82 = arith.constant 0 : index
    %c5_83 = arith.constant 5 : index
    %c0_84 = arith.constant 0 : index
    %432 = vector.load %arg4[%c1_81, %c0_82, %c5_83, %c0_84] : memref<2x1x22x22xf32, #tpu.memory_space<vmem>>, vector<1x1x16x22xf32>
    %433 = vector.shape_cast %432 : vector<1x1x16x22xf32> to vector<1x16x22xf32>
    %434 = vector.extract_strided_slice %433 {offsets = [0, 0, 0], sizes = [1, 16, 16], strides = [1, 1, 1]} : vector<1x16x22xf32> to vector<1x16x16xf32>
    %c71 = arith.constant 71 : index
    %435 = memref.load %arg2[%c71] : memref<98xf32, #tpu.memory_space<smem>>
    %436 = vector.broadcast %435 : f32 to vector<1x16x16xf32>
    %437 = arith.mulf %434, %436 : vector<1x16x16xf32>
    %438 = arith.addf %320, %437 : vector<1x16x16xf32>
    %439 = vector.extract_strided_slice %433 {offsets = [0, 0, 1], sizes = [1, 16, 16], strides = [1, 1, 1]} : vector<1x16x22xf32> to vector<1x16x16xf32>
    %c73 = arith.constant 73 : index
    %440 = memref.load %arg2[%c73] : memref<98xf32, #tpu.memory_space<smem>>
    %441 = vector.broadcast %440 : f32 to vector<1x16x16xf32>
    %442 = arith.mulf %439, %441 : vector<1x16x16xf32>
    %443 = arith.addf %438, %442 : vector<1x16x16xf32>
    %444 = vector.extract_strided_slice %433 {offsets = [0, 0, 2], sizes = [1, 16, 16], strides = [1, 1, 1]} : vector<1x16x22xf32> to vector<1x16x16xf32>
    %c75 = arith.constant 75 : index
    %445 = memref.load %arg2[%c75] : memref<98xf32, #tpu.memory_space<smem>>
    %446 = vector.broadcast %445 : f32 to vector<1x16x16xf32>
    %447 = arith.mulf %444, %446 : vector<1x16x16xf32>
    %448 = arith.addf %443, %447 : vector<1x16x16xf32>
    %449 = vector.extract_strided_slice %433 {offsets = [0, 0, 3], sizes = [1, 16, 16], strides = [1, 1, 1]} : vector<1x16x22xf32> to vector<1x16x16xf32>
    %c77 = arith.constant 77 : index
    %450 = memref.load %arg2[%c77] : memref<98xf32, #tpu.memory_space<smem>>
    %451 = vector.broadcast %450 : f32 to vector<1x16x16xf32>
    %452 = arith.mulf %449, %451 : vector<1x16x16xf32>
    %453 = arith.addf %448, %452 : vector<1x16x16xf32>
    %454 = vector.extract_strided_slice %433 {offsets = [0, 0, 4], sizes = [1, 16, 16], strides = [1, 1, 1]} : vector<1x16x22xf32> to vector<1x16x16xf32>
    %c79 = arith.constant 79 : index
    %455 = memref.load %arg2[%c79] : memref<98xf32, #tpu.memory_space<smem>>
    %456 = vector.broadcast %455 : f32 to vector<1x16x16xf32>
    %457 = arith.mulf %454, %456 : vector<1x16x16xf32>
    %458 = arith.addf %453, %457 : vector<1x16x16xf32>
    %459 = vector.extract_strided_slice %433 {offsets = [0, 0, 5], sizes = [1, 16, 16], strides = [1, 1, 1]} : vector<1x16x22xf32> to vector<1x16x16xf32>
    %c81 = arith.constant 81 : index
    %460 = memref.load %arg2[%c81] : memref<98xf32, #tpu.memory_space<smem>>
    %461 = vector.broadcast %460 : f32 to vector<1x16x16xf32>
    %462 = arith.mulf %459, %461 : vector<1x16x16xf32>
    %463 = arith.addf %458, %462 : vector<1x16x16xf32>
    %464 = vector.extract_strided_slice %433 {offsets = [0, 0, 6], sizes = [1, 16, 16], strides = [1, 1, 1]} : vector<1x16x22xf32> to vector<1x16x16xf32>
    %c83 = arith.constant 83 : index
    %465 = memref.load %arg2[%c83] : memref<98xf32, #tpu.memory_space<smem>>
    %466 = vector.broadcast %465 : f32 to vector<1x16x16xf32>
    %467 = arith.mulf %464, %466 : vector<1x16x16xf32>
    %468 = arith.addf %463, %467 : vector<1x16x16xf32>
    %c0_85 = arith.constant 0 : index
    %c0_86 = arith.constant 0 : index
    %c6_87 = arith.constant 6 : index
    %c0_88 = arith.constant 0 : index
    %469 = vector.load %arg4[%c0_85, %c0_86, %c6_87, %c0_88] : memref<2x1x22x22xf32, #tpu.memory_space<vmem>>, vector<1x1x16x22xf32>
    %470 = vector.shape_cast %469 : vector<1x1x16x22xf32> to vector<1x16x22xf32>
    %471 = vector.extract_strided_slice %470 {offsets = [0, 0, 0], sizes = [1, 16, 16], strides = [1, 1, 1]} : vector<1x16x22xf32> to vector<1x16x16xf32>
    %c84 = arith.constant 84 : index
    %472 = memref.load %arg2[%c84] : memref<98xf32, #tpu.memory_space<smem>>
    %473 = vector.broadcast %472 : f32 to vector<1x16x16xf32>
    %474 = arith.mulf %471, %473 : vector<1x16x16xf32>
    %475 = arith.addf %357, %474 : vector<1x16x16xf32>
    %476 = vector.extract_strided_slice %470 {offsets = [0, 0, 1], sizes = [1, 16, 16], strides = [1, 1, 1]} : vector<1x16x22xf32> to vector<1x16x16xf32>
    %c86 = arith.constant 86 : index
    %477 = memref.load %arg2[%c86] : memref<98xf32, #tpu.memory_space<smem>>
    %478 = vector.broadcast %477 : f32 to vector<1x16x16xf32>
    %479 = arith.mulf %476, %478 : vector<1x16x16xf32>
    %480 = arith.addf %475, %479 : vector<1x16x16xf32>
    %481 = vector.extract_strided_slice %470 {offsets = [0, 0, 2], sizes = [1, 16, 16], strides = [1, 1, 1]} : vector<1x16x22xf32> to vector<1x16x16xf32>
    %c88 = arith.constant 88 : index
    %482 = memref.load %arg2[%c88] : memref<98xf32, #tpu.memory_space<smem>>
    %483 = vector.broadcast %482 : f32 to vector<1x16x16xf32>
    %484 = arith.mulf %481, %483 : vector<1x16x16xf32>
    %485 = arith.addf %480, %484 : vector<1x16x16xf32>
    %486 = vector.extract_strided_slice %470 {offsets = [0, 0, 3], sizes = [1, 16, 16], strides = [1, 1, 1]} : vector<1x16x22xf32> to vector<1x16x16xf32>
    %c90 = arith.constant 90 : index
    %487 = memref.load %arg2[%c90] : memref<98xf32, #tpu.memory_space<smem>>
    %488 = vector.broadcast %487 : f32 to vector<1x16x16xf32>
    %489 = arith.mulf %486, %488 : vector<1x16x16xf32>
    %490 = arith.addf %485, %489 : vector<1x16x16xf32>
    %491 = vector.extract_strided_slice %470 {offsets = [0, 0, 4], sizes = [1, 16, 16], strides = [1, 1, 1]} : vector<1x16x22xf32> to vector<1x16x16xf32>
    %c92 = arith.constant 92 : index
    %492 = memref.load %arg2[%c92] : memref<98xf32, #tpu.memory_space<smem>>
    %493 = vector.broadcast %492 : f32 to vector<1x16x16xf32>
    %494 = arith.mulf %491, %493 : vector<1x16x16xf32>
    %495 = arith.addf %490, %494 : vector<1x16x16xf32>
    %496 = vector.extract_strided_slice %470 {offsets = [0, 0, 5], sizes = [1, 16, 16], strides = [1, 1, 1]} : vector<1x16x22xf32> to vector<1x16x16xf32>
    %c94 = arith.constant 94 : index
    %497 = memref.load %arg2[%c94] : memref<98xf32, #tpu.memory_space<smem>>
    %498 = vector.broadcast %497 : f32 to vector<1x16x16xf32>
    %499 = arith.mulf %496, %498 : vector<1x16x16xf32>
    %500 = arith.addf %495, %499 : vector<1x16x16xf32>
    %501 = vector.extract_strided_slice %470 {offsets = [0, 0, 6], sizes = [1, 16, 16], strides = [1, 1, 1]} : vector<1x16x22xf32> to vector<1x16x16xf32>
    %c96 = arith.constant 96 : index
    %502 = memref.load %arg2[%c96] : memref<98xf32, #tpu.memory_space<smem>>
    %503 = vector.broadcast %502 : f32 to vector<1x16x16xf32>
    %504 = arith.mulf %501, %503 : vector<1x16x16xf32>
    %505 = arith.addf %500, %504 : vector<1x16x16xf32>
    %c1_89 = arith.constant 1 : index
    %c0_90 = arith.constant 0 : index
    %c6_91 = arith.constant 6 : index
    %c0_92 = arith.constant 0 : index
    %506 = vector.load %arg4[%c1_89, %c0_90, %c6_91, %c0_92] : memref<2x1x22x22xf32, #tpu.memory_space<vmem>>, vector<1x1x16x22xf32>
    %507 = vector.shape_cast %506 : vector<1x1x16x22xf32> to vector<1x16x22xf32>
    %508 = vector.extract_strided_slice %507 {offsets = [0, 0, 0], sizes = [1, 16, 16], strides = [1, 1, 1]} : vector<1x16x22xf32> to vector<1x16x16xf32>
    %c85 = arith.constant 85 : index
    %509 = memref.load %arg2[%c85] : memref<98xf32, #tpu.memory_space<smem>>
    %510 = vector.broadcast %509 : f32 to vector<1x16x16xf32>
    %511 = arith.mulf %508, %510 : vector<1x16x16xf32>
    %512 = arith.addf %394, %511 : vector<1x16x16xf32>
    %513 = vector.extract_strided_slice %507 {offsets = [0, 0, 1], sizes = [1, 16, 16], strides = [1, 1, 1]} : vector<1x16x22xf32> to vector<1x16x16xf32>
    %c87 = arith.constant 87 : index
    %514 = memref.load %arg2[%c87] : memref<98xf32, #tpu.memory_space<smem>>
    %515 = vector.broadcast %514 : f32 to vector<1x16x16xf32>
    %516 = arith.mulf %513, %515 : vector<1x16x16xf32>
    %517 = arith.addf %512, %516 : vector<1x16x16xf32>
    %518 = vector.extract_strided_slice %507 {offsets = [0, 0, 2], sizes = [1, 16, 16], strides = [1, 1, 1]} : vector<1x16x22xf32> to vector<1x16x16xf32>
    %c89 = arith.constant 89 : index
    %519 = memref.load %arg2[%c89] : memref<98xf32, #tpu.memory_space<smem>>
    %520 = vector.broadcast %519 : f32 to vector<1x16x16xf32>
    %521 = arith.mulf %518, %520 : vector<1x16x16xf32>
    %522 = arith.addf %517, %521 : vector<1x16x16xf32>
    %523 = vector.extract_strided_slice %507 {offsets = [0, 0, 3], sizes = [1, 16, 16], strides = [1, 1, 1]} : vector<1x16x22xf32> to vector<1x16x16xf32>
    %c91 = arith.constant 91 : index
    %524 = memref.load %arg2[%c91] : memref<98xf32, #tpu.memory_space<smem>>
    %525 = vector.broadcast %524 : f32 to vector<1x16x16xf32>
    %526 = arith.mulf %523, %525 : vector<1x16x16xf32>
    %527 = arith.addf %522, %526 : vector<1x16x16xf32>
    %528 = vector.extract_strided_slice %507 {offsets = [0, 0, 4], sizes = [1, 16, 16], strides = [1, 1, 1]} : vector<1x16x22xf32> to vector<1x16x16xf32>
    %c93 = arith.constant 93 : index
    %529 = memref.load %arg2[%c93] : memref<98xf32, #tpu.memory_space<smem>>
    %530 = vector.broadcast %529 : f32 to vector<1x16x16xf32>
    %531 = arith.mulf %528, %530 : vector<1x16x16xf32>
    %532 = arith.addf %527, %531 : vector<1x16x16xf32>
    %533 = vector.extract_strided_slice %507 {offsets = [0, 0, 5], sizes = [1, 16, 16], strides = [1, 1, 1]} : vector<1x16x22xf32> to vector<1x16x16xf32>
    %c95 = arith.constant 95 : index
    %534 = memref.load %arg2[%c95] : memref<98xf32, #tpu.memory_space<smem>>
    %535 = vector.broadcast %534 : f32 to vector<1x16x16xf32>
    %536 = arith.mulf %533, %535 : vector<1x16x16xf32>
    %537 = arith.addf %532, %536 : vector<1x16x16xf32>
    %538 = vector.extract_strided_slice %507 {offsets = [0, 0, 6], sizes = [1, 16, 16], strides = [1, 1, 1]} : vector<1x16x22xf32> to vector<1x16x16xf32>
    %c97 = arith.constant 97 : index
    %539 = memref.load %arg2[%c97] : memref<98xf32, #tpu.memory_space<smem>>
    %540 = vector.broadcast %539 : f32 to vector<1x16x16xf32>
    %541 = arith.mulf %538, %540 : vector<1x16x16xf32>
    %542 = arith.addf %537, %541 : vector<1x16x16xf32>
    %543 = arith.addf %505, %542 : vector<1x16x16xf32>
    %544 = arith.addf %431, %468 : vector<1x16x16xf32>
    %545 = arith.addf %543, %544 : vector<1x16x16xf32>
    %cst_93 = arith.constant 0.000000e+00 : f32
    %546 = vector.broadcast %cst_93 : f32 to vector<1x16x16xf32>
    %547 = arith.subf %546, %545 : vector<1x16x16xf32>
    %548 = math.exp %547 : vector<1x16x16xf32>
    %cst_94 = arith.constant 1.000000e+00 : f32
    %549 = vector.broadcast %cst_94 : f32 to vector<1x16x16xf32>
    %550 = arith.addf %549, %548 : vector<1x16x16xf32>
    %cst_95 = arith.constant 1.000000e+00 : f32
    %551 = vector.broadcast %cst_95 : f32 to vector<1x16x16xf32>
    %552 = arith.divf %551, %550 : vector<1x16x16xf32>
    %553 = vector.shape_cast %552 : vector<1x16x16xf32> to vector<1x1x256xf32>
    %554 = vector.broadcast %553 : vector<1x1x256xf32> to vector<1x8x256xf32>
    %555 = arith.mulf %0, %554 : vector<1x8x256xf32>
    %c0_96 = arith.constant 0 : index
    %c0_97 = arith.constant 0 : index
    %c0_98 = arith.constant 0 : index
    %556 = vector.load %arg3[%c0_96, %c0_97, %c0_98] : memref<1x8x256xf32, #tpu.memory_space<vmem>>, vector<1x8x256xf32>
    tpu.vector_store %arg3[%c0_96, %c0_97, %c0_98], %555 {strides = array<i32>} : memref<1x8x256xf32, #tpu.memory_space<vmem>>, vector<1x8x256xf32>,
    return
  }
  func.func @transform_0(%arg0: i32) -> (i32, i32, i32) {
    %c0_i32 = arith.constant 0 : i32
    %c0_i32_0 = arith.constant 0 : i32
    %c0_i32_1 = arith.constant 0 : i32
    return %arg0, %c0_i32, %c0_i32_0 : i32, i32, i32
  }
  func.func @transform_1(%arg0: i32) -> i32 {
    %c0_i32 = arith.constant 0 : i32
    %c0_i32_0 = arith.constant 0 : i32
    return %c0_i32 : i32
  }
  func.func @transform_2(%arg0: i32) -> (i32, i32, i32) {
    %c0_i32 = arith.constant 0 : i32
    %c0_i32_0 = arith.constant 0 : i32
    %c0_i32_1 = arith.constant 0 : i32
    return %arg0, %c0_i32, %c0_i32_0 : i32, i32, i32
  }
}

</mosaic_0001>

<llo_original>
// kernel: sam.1
$region0: #{sam.1}
  #allocation0 [shape = 'u32[]', space=smem, size = 0x4, offset = 0x4, fixed_abs, tag = 'smem constant byte address 0x4 - core index']
  #allocation1 [shape = 'u32[144,128]{1,0:T(1,128)}', space=vmem, size = 0x12000, scoped, tag = 'internal scratch']
  #allocation2 [shape = 'f32[2,1,22,22]{3,2,1,0:T(8,128)}', space=vmem, size = 0x6000, scoped, tag = 'scratch operand']
  %s0 = inlined_call_operand.vmem [shape: f32[2,8,256], index: 0, kind: input, shape index: {}]
  %s1 = inlined_call_operand.vmem [shape: f32[98], index: 1, kind: input, shape index: {}]
  %s2 = inlined_call_operand.vmem [shape: f32[2,8,256], index: 2, kind: output, shape index: {}]
  %s3 = sld [smem:[#allocation0]]
  $region45: #{sam.1} parent=0
    _
  %s5 = ssub.s32 1, %s3
  %s6 = scalar_select 0, %s5, %s3
  $region1: #{sam.1} parent=0
    #allocation3 [shape = 'u8[512]{0}', space=smem, size = 0x200, scoped, tag = 'input window, operand 1, single buffered']
    #allocation4 [shape = 's32[2]{0}', space=sflag, size = 0x8, scoped, tag = 'scoped memory for sam.1']
    %7 = vsyncpa [#allocation4], 0
    loop: start=0, step=1, limit=4
    $region2: #{sam.1} parent=1 // loop_pre_header
      _
    $region3: #{sam.1} parent=1 // loop_header
      %s9 = sphi 0, %s13
      %p10 = scmp.ge.s32.totalorder %s9, 4
      %s19 = sphi 0, %s21
      %s22 = sphi 0, %s19
      %s23 = sphi 0, %s22
      %s39 = sphi 0, %s23
      %s43 = sphi 0, %s43
      %s45 = sphi 0, %s43
      %s46 = sphi 0, %s45
      %s60 = sphi 0, %s46
      %s66 = sphi 0, %s68
      %s69 = sphi 0, %s66
      %s70 = sphi 0, %s69
      %s86 = sphi 0, %s70
    $region4: #{sam.1} parent=1 // loop_header_branch
      %12 = sbr.rel (%p10) target = $region8
    $region5: #{sam.1} parent=1 // loop_body
      %s14 = ssub.s32 %s9, 1
      %s15 = ssub.s32 %s9, 2
      %s16 = sadd.s32 %s9, 1
      %s17 = ssub.s32 %s9, %s16
      %p18 = scmp.eq.s32.totalorder %s17, 0
      %s20 = sadd.s32 %s19, 1
      %s21 = scalar_select %p18, %s19, %s20
      %p24 = pneg %p18
      %p25 = scmp.eq.s32.totalorder %s9, 1
      %p26 = por %p24, %p25
      %p27 = scmp.ne.s32.totalorder %s19, %s22
      %p28 = scmp.eq.s32.totalorder %s9, 0
      %p29 = por %p27, %p28
      %p30 = scmp.ne.s32.totalorder %s19, %s22
      %p31 = scmp.eq.s32.totalorder %s14, 1
      %p32 = por %p30, %p31
      %p33 = scmp.ne.s32.totalorder %s22, %s23
      %p34 = scmp.eq.s32.totalorder %s14, 0
      %p35 = por %p33, %p34
      %p36 = scmp.ne.s32.totalorder %s22, %s23
      %p37 = scmp.eq.s32.totalorder %s15, 1
      %p38 = por %p36, %p37
      %p40 = scmp.ne.s32.totalorder %s23, %s39
      %p41 = scmp.eq.s32.totalorder %s15, 0
      %p42 = por %p40, %p41
      %s44 = sadd.s32 %s43, 1
      %p47 = scmp.eq.s32.totalorder %s9, 1
      %p48 = scmp.ne.s32.totalorder %s43, %s45
      %p49 = scmp.eq.s32.totalorder %s9, 0
      %p50 = por %p48, %p49
      %p51 = scmp.ne.s32.totalorder %s43, %s45
      %p52 = scmp.eq.s32.totalorder %s14, 1
      %p53 = por %p51, %p52
      %p54 = scmp.ne.s32.totalorder %s45, %s46
      %p55 = scmp.eq.s32.totalorder %s14, 0
      %p56 = por %p54, %p55
      %p57 = scmp.ne.s32.totalorder %s45, %s46
      %p58 = scmp.eq.s32.totalorder %s15, 1
      %p59 = por %p57, %p58
      %p61 = scmp.ne.s32.totalorder %s46, %s60
      %p62 = scmp.eq.s32.totalorder %s15, 0
      %p63 = por %p61, %p62
      %s64 = ssub.s32 %s9, %s16
      %p65 = scmp.eq.s32.totalorder %s64, 0
      %s67 = sadd.s32 %s66, 1
      %s68 = scalar_select %p65, %s66, %s67
      %p71 = pneg %p65
      %p72 = scmp.eq.s32.totalorder %s9, 1
      %p73 = por %p71, %p72
      %p74 = scmp.ne.s32.totalorder %s66, %s69
      %p75 = scmp.eq.s32.totalorder %s9, 0
      %p76 = por %p74, %p75
      %p77 = scmp.ne.s32.totalorder %s66, %s69
      %p78 = scmp.eq.s32.totalorder %s14, 1
      %p79 = por %p77, %p78
      %p80 = scmp.ne.s32.totalorder %s69, %s70
      %p81 = scmp.eq.s32.totalorder %s14, 0
      %p82 = por %p80, %p81
      %p83 = scmp.ne.s32.totalorder %s69, %s70
      %p84 = scmp.eq.s32.totalorder %s15, 1
      %p85 = por %p83, %p84
      %p87 = scmp.ne.s32.totalorder %s70, %s86
      %p88 = scmp.eq.s32.totalorder %s15, 0
      %p89 = por %p87, %p88
      %p90 = scmp.le.s32.totalorder 1, %s9
      %p91 = scmp.lt.s32.totalorder %s9, 3
      %p92 = pnand %p90, %p91
      %p93 = pneg %p92
      // Predicated region
      $region9: #{sam.1} parent=5 // pred_check
        _
      $region10: #{sam.1} parent=5 // pred_check_branch
        %95 = sbr.rel (%p92) target = $region12
      $region11: #{sam.1} parent=5 // pred_region
        %s96 = ssub.s32 %s9, 1
        // Predicated region
        $region13: #{sam.1} parent=11 // pred_check
          %p97 = pneg %p56
        $region14: #{sam.1} parent=11 // pred_check_branch
          %99 = sbr.rel (%p97) target = $region16
        $region15: #{sam.1} parent=11 // pred_region
          %s101 = ssub.s32 16, 16
          %102 = vsyncadd [#allocation4], %s101
          %s104 = sshll.u32 %s1, 4
          %s105 = int_to_ptr.vmem [resolvable:$true] %s104
          %107 = dma.vmem_to_smem %s105, 16, [#allocation3], [#allocation4]
        $region16: #{sam.1} parent=11 // pred_fallthru
          _
      $region12: #{sam.1} parent=5 // pred_fallthru
        _
      %p108 = scmp.lt.s32.totalorder %s9, 2
      // Predicated region
      $region17: #{sam.1} parent=5 // pred_check
        %p109 = pneg %p108
      $region18: #{sam.1} parent=5 // pred_check_branch
        %111 = sbr.rel (%p109) target = $region20
      $region19: #{sam.1} parent=5 // pred_region
        // Predicated region
        $region21: #{sam.1} parent=19 // pred_check
          %p112 = pneg %p29
        $region22: #{sam.1} parent=19 // pred_check_branch
          %114 = sbr.rel (%p112) target = $region24
        $region23: #{sam.1} parent=19 // pred_region
          %p115 = scmp.lt.s32.totalorder %s9, 1
          %s116 = scalar_select %p115, %s9, 1
          %s117 = smul.addr %s116, 2
          %s118 = smul.addr %s117, 8
          %s119 = scalar_lea.vmem %s0, %s118
        $region24: #{sam.1} parent=19 // pred_fallthru
          _
      $region20: #{sam.1} parent=5 // pred_fallthru
        _
      %p120 = scmp.le.s32.totalorder 1, %s9
      %p121 = scmp.lt.s32.totalorder %s9, 3
      %p122 = pnand %p120, %p121
      %p123 = pneg %p122
      // Predicated region
      $region25: #{sam.1} parent=5 // pred_check
        _
      $region26: #{sam.1} parent=5 // pred_check_branch
        %125 = sbr.rel (%p122) target = $region28
      $region27: #{sam.1} parent=5 // pred_region
        %s126 = ssub.s32 %s9, 1
        // Predicated region
        $region29: #{sam.1} parent=27 // pred_check
          %p127 = pneg %p56
        $region30: #{sam.1} parent=27 // pred_check_branch
          %129 = sbr.rel (%p127) target = $region32
        $region31: #{sam.1} parent=27 // pred_region
          %130 = dma.done [#allocation4], 16
        $region32: #{sam.1} parent=27 // pred_fallthru
          _
        %131 = sfence
        %p132 = scmp.lt.s32.totalorder %s14, 1
        %s133 = scalar_select %p132, %s14, 1
        %s134 = smul.addr %s133, 2
        %s135 = smul.addr %s134, 8
        %s136 = scalar_lea.vmem %s0, %s135
        %p137 = pneg %p35
        %p138 = pneg %p32
        %p139 = pneg %p56
        %p140 = pneg %p53
        %p141 = pneg %p82
        %p142 = pneg %p79
        %p143 = scmp.lt.s32.totalorder %s14, 1
        %s144 = scalar_select %p143, %s14, 1
        %s145 = smul.addr %s144, 2
        %s146 = smul.addr %s145, 8
        %s147 = scalar_lea.vmem %s2, %s146
        %p148 = scmp.lt.s32.totalorder %s14, 1
        %s149 = scalar_select %p148, %s14, 1
        %s150 = smul.addr %s149, 2
        %s151 = smul.addr %s150, 8
        %s152 = scalar_lea.vmem %s0, %s151
        %p153 = scmp.lt.s32.totalorder %s14, 1
        %s154 = scalar_select %p153, %s14, 1
        %s155 = smul.addr %s154, 2
        %s156 = smul.addr %s155, 8
        %s157 = scalar_lea.vmem %s2, %s156
        %v158 = vld [vmem:[%s152] sm:$0xff]
        %v159 = vld [vmem:[%s152 + $0x8] sm:$0xff]
        %v160 = vrot.slane %v158, 4
        %v161 = vadd.f32 %v158, %v160
        %v162 = vrot.slane %v161, 2
        %v163 = vadd.f32 %v161, %v162
        %v164 = vrot.slane %v163, 1
        %v165 = vadd.f32 %v163, %v164
        %v166 = vrot.slane %v159, 4
        %v167 = vadd.f32 %v159, %v166
        %v168 = vrot.slane %v167, 2
        %v169 = vadd.f32 %v167, %v168
        %v170 = vrot.slane %v169, 1
        %v171 = vadd.f32 %v169, %v170
        %v172 = vrcp.pop 8.0
        %v173 = vmul.f32 %v165, %v172
        %v174 = vmul.f32 %v171, %v172
        %v175 = vrot.slane %v158, 4
        %v176 = vmax.f32 %v158, %v175
        %v177 = vrot.slane %v176, 2
        %v178 = vmax.f32 %v176, %v177
        %v179 = vrot.slane %v178, 1
        %v180 = vmax.f32 %v178, %v179
        %v181 = vrot.slane %v159, 4
        %v182 = vmax.f32 %v159, %v181
        %v183 = vrot.slane %v182, 2
        %v184 = vmax.f32 %v182, %v183
        %v185 = vrot.slane %v184, 1
        %v186 = vmax.f32 %v184, %v185
        %vm187 = vcmask 174080
        %188 = vst.msk [vmem:[#allocation2] sm:$0x7] %vm187, 0.0
        %189 = vst.msk [vmem:[#allocation2 + $0x18] sm:$0x7] %vm187, 0.0
        %190 = vst.msk [vmem:[#allocation2 + $0x13] sm:$0x7] %vm187, 0.0
        %191 = vst.msk [vmem:[#allocation2 + $0x2b] sm:$0x7] %vm187, 0.0
        %vm192 = vcmask 23552
        %193 = vst.msk [vmem:[#allocation2 + $0x3] sm:$0xff] %vm192, 0.0
        %194 = vst.msk [vmem:[#allocation2 + $0xb] sm:$0xff] %vm192, 0.0
        %195 = vst.msk [vmem:[#allocation2 + $0x1b] sm:$0xff] %vm192, 0.0
        %196 = vst.msk [vmem:[#allocation2 + $0x23] sm:$0xff] %vm192, 0.0
        %vm197 = vcmask 179352
        %198 = vst.msk [vmem:[#allocation2 + $0x3] sm:$0xff] %vm197, 0.0
        %199 = vst.msk [vmem:[#allocation2 + $0xb] sm:$0xff] %vm197, 0.0
        %200 = vst.msk [vmem:[#allocation2 + $0x1b] sm:$0xff] %vm197, 0.0
        %201 = vst.msk [vmem:[#allocation2 + $0x23] sm:$0xff] %vm197, 0.0
        %203 = vrot.lane.b32.xlu0 %v173, 112
        %v204 = vpop.permute.xlu0 %203
        %206 = vrot.lane.b32.xlu0 %v173, 96
        %v207 = vpop.permute.xlu0 %206
        %209 = vrot.lane.b32.xlu0 %v173, 80
        %v210 = vpop.permute.xlu0 %209
        %212 = vrot.lane.b32.xlu0 %v173, 64
        %v213 = vpop.permute.xlu0 %212
        %215 = vrot.lane.b32.xlu0 %v173, 48
        %v216 = vpop.permute.xlu0 %215
        %218 = vrot.lane.b32.xlu0 %v173, 32
        %v219 = vpop.permute.xlu0 %218
        %221 = vrot.lane.b32.xlu0 %v173, 16
        %v222 = vpop.permute.xlu0 %221
        %225 = vrot.lane.b32.xlu0 %v174, 112
        %v226 = vpop.permute.xlu0 %225
        %228 = vrot.lane.b32.xlu0 %v174, 96
        %v229 = vpop.permute.xlu0 %228
        %231 = vrot.lane.b32.xlu0 %v174, 80
        %v232 = vpop.permute.xlu0 %231
        %234 = vrot.lane.b32.xlu0 %v174, 64
        %v235 = vpop.permute.xlu0 %234
        %237 = vrot.lane.b32.xlu0 %v174, 48
        %v238 = vpop.permute.xlu0 %237
        %240 = vrot.lane.b32.xlu0 %v174, 32
        %v241 = vpop.permute.xlu0 %240
        %243 = vrot.lane.b32.xlu0 %v174, 16
        %v244 = vpop.permute.xlu0 %243
        %v246 = vcombine.low %v173, %v207
        %v248 = vunpack.c.l.s4 1983009808
        %v249 = vunpack.c.0.s8 %v248
        %v250 = vlaneseq
        %v251 = vshrl.u32 %v250, 7
        %v252 = vsub.s32 %v249, %v251
        %v253 = vrot.slane %v246, %v252
        %v254 = vcombine.low %v204, %v210
        %v256 = vunpack.c.l.s4 1983009808
        %v257 = vunpack.c.0.s8 %v256
        %v258 = vlaneseq
        %v259 = vshrl.u32 %v258, 7
        %v260 = vsub.s32 %v257, %v259
        %v261 = vrot.slane %v254, %v260
        %v262 = vcombine.low %v213, %v219
        %v264 = vunpack.c.l.s4 1983009808
        %v265 = vunpack.c.0.s8 %v264
        %v266 = vlaneseq
        %v267 = vshrl.u32 %v266, 7
        %v268 = vsub.s32 %v265, %v267
        %v269 = vrot.slane %v262, %v268
        %v270 = vcombine.low %v216, %v222
        %v272 = vunpack.c.l.s4 1983009808
        %v273 = vunpack.c.0.s8 %v272
        %v274 = vlaneseq
        %v275 = vshrl.u32 %v274, 7
        %v276 = vsub.s32 %v273, %v275
        %v277 = vrot.slane %v270, %v276
        %v278 = vcombine.low %v253, %v261
        %v280 = vunpack.c.l.s4 1934713408
        %v281 = vunpack.c.0.s8 %v280
        %v282 = vlaneseq
        %v283 = vshrl.u32 %v282, 7
        %v284 = vsub.s32 %v281, %v283
        %v285 = vrot.slane %v278, %v284
        %v286 = vcombine.low %v269, %v277
        %v288 = vunpack.c.l.s4 1934713408
        %v289 = vunpack.c.0.s8 %v288
        %v290 = vlaneseq
        %v291 = vshrl.u32 %v290, 7
        %v292 = vsub.s32 %v289, %v291
        %v293 = vrot.slane %v286, %v292
        %v294 = vcombine.low %v285, %v293
        %v295 = vcombine.low %v174, %v229
        %v297 = vunpack.c.l.s4 1983009808
        %v298 = vunpack.c.0.s8 %v297
        %v299 = vlaneseq
        %v300 = vshrl.u32 %v299, 7
        %v301 = vsub.s32 %v298, %v300
        %v302 = vrot.slane %v295, %v301
        %v303 = vcombine.low %v226, %v232
        %v305 = vunpack.c.l.s4 1983009808
        %v306 = vunpack.c.0.s8 %v305
        %v307 = vlaneseq
        %v308 = vshrl.u32 %v307, 7
        %v309 = vsub.s32 %v306, %v308
        %v310 = vrot.slane %v303, %v309
        %v311 = vcombine.low %v235, %v241
        %v313 = vunpack.c.l.s4 1983009808
        %v314 = vunpack.c.0.s8 %v313
        %v315 = vlaneseq
        %v316 = vshrl.u32 %v315, 7
        %v317 = vsub.s32 %v314, %v316
        %v318 = vrot.slane %v311, %v317
        %v319 = vcombine.low %v238, %v244
        %v321 = vunpack.c.l.s4 1983009808
        %v322 = vunpack.c.0.s8 %v321
        %v323 = vlaneseq
        %v324 = vshrl.u32 %v323, 7
        %v325 = vsub.s32 %v322, %v324
        %v326 = vrot.slane %v319, %v325
        %v327 = vcombine.low %v302, %v310
        %v329 = vunpack.c.l.s4 1934713408
        %v330 = vunpack.c.0.s8 %v329
        %v331 = vlaneseq
        %v332 = vshrl.u32 %v331, 7
        %v333 = vsub.s32 %v330, %v332
        %v334 = vrot.slane %v327, %v333
        %v335 = vcombine.low %v318, %v326
        %v337 = vunpack.c.l.s4 1934713408
        %v338 = vunpack.c.0.s8 %v337
        %v339 = vlaneseq
        %v340 = vshrl.u32 %v339, 7
        %v341 = vsub.s32 %v338, %v340
        %v342 = vrot.slane %v335, %v341
        %v343 = vcombine.low %v334, %v342
        %346 = vrot.lane.b32.xlu0 %v294, 3
        %v347 = vpop.permute.xlu0 %346
        %348 = vrot.lane.b32.xlu0 %v343, 3
        %v349 = vpop.permute.xlu0 %348
        %vm352 = vcmask 154648
        %353 = vst.msk [vmem:[#allocation2 + $0x3] sm:$0xff] %vm352, %v347
        %354 = vst.msk [vmem:[#allocation2 + $0xb] sm:$0xff] %vm352, %v349
        %356 = vrot.lane.b32.xlu0 %v180, 112
        %v357 = vpop.permute.xlu0 %356
        %359 = vrot.lane.b32.xlu0 %v180, 96
        %v360 = vpop.permute.xlu0 %359
        %362 = vrot.lane.b32.xlu0 %v180, 80
        %v363 = vpop.permute.xlu0 %362
        %365 = vrot.lane.b32.xlu0 %v180, 64
        %v366 = vpop.permute.xlu0 %365
        %368 = vrot.lane.b32.xlu0 %v180, 48
        %v369 = vpop.permute.xlu0 %368
        %371 = vrot.lane.b32.xlu0 %v180, 32
        %v372 = vpop.permute.xlu0 %371
        %374 = vrot.lane.b32.xlu0 %v180, 16
        %v375 = vpop.permute.xlu0 %374
        %378 = vrot.lane.b32.xlu0 %v186, 112
        %v379 = vpop.permute.xlu0 %378
        %381 = vrot.lane.b32.xlu0 %v186, 96
        %v382 = vpop.permute.xlu0 %381
        %384 = vrot.lane.b32.xlu0 %v186, 80
        %v385 = vpop.permute.xlu0 %384
        %387 = vrot.lane.b32.xlu0 %v186, 64
        %v388 = vpop.permute.xlu0 %387
        %390 = vrot.lane.b32.xlu0 %v186, 48
        %v391 = vpop.permute.xlu0 %390
        %393 = vrot.lane.b32.xlu0 %v186, 32
        %v394 = vpop.permute.xlu0 %393
        %396 = vrot.lane.b32.xlu0 %v186, 16
        %v397 = vpop.permute.xlu0 %396
        %v399 = vcombine.low %v180, %v360
        %v401 = vunpack.c.l.s4 1983009808
        %v402 = vunpack.c.0.s8 %v401
        %v403 = vlaneseq
        %v404 = vshrl.u32 %v403, 7
        %v405 = vsub.s32 %v402, %v404
        %v406 = vrot.slane %v399, %v405
        %v407 = vcombine.low %v357, %v363
        %v409 = vunpack.c.l.s4 1983009808
        %v410 = vunpack.c.0.s8 %v409
        %v411 = vlaneseq
        %v412 = vshrl.u32 %v411, 7
        %v413 = vsub.s32 %v410, %v412
        %v414 = vrot.slane %v407, %v413
        %v415 = vcombine.low %v366, %v372
        %v417 = vunpack.c.l.s4 1983009808
        %v418 = vunpack.c.0.s8 %v417
        %v419 = vlaneseq
        %v420 = vshrl.u32 %v419, 7
        %v421 = vsub.s32 %v418, %v420
        %v422 = vrot.slane %v415, %v421
        %v423 = vcombine.low %v369, %v375
        %v425 = vunpack.c.l.s4 1983009808
        %v426 = vunpack.c.0.s8 %v425
        %v427 = vlaneseq
        %v428 = vshrl.u32 %v427, 7
        %v429 = vsub.s32 %v426, %v428
        %v430 = vrot.slane %v423, %v429
        %v431 = vcombine.low %v406, %v414
        %v433 = vunpack.c.l.s4 1934713408
        %v434 = vunpack.c.0.s8 %v433
        %v435 = vlaneseq
        %v436 = vshrl.u32 %v435, 7
        %v437 = vsub.s32 %v434, %v436
        %v438 = vrot.slane %v431, %v437
        %v439 = vcombine.low %v422, %v430
        %v441 = vunpack.c.l.s4 1934713408
        %v442 = vunpack.c.0.s8 %v441
        %v443 = vlaneseq
        %v444 = vshrl.u32 %v443, 7
        %v445 = vsub.s32 %v442, %v444
        %v446 = vrot.slane %v439, %v445
        %v447 = vcombine.low %v438, %v446
        %v448 = vcombine.low %v186, %v382
        %v450 = vunpack.c.l.s4 1983009808
        %v451 = vunpack.c.0.s8 %v450
        %v452 = vlaneseq
        %v453 = vshrl.u32 %v452, 7
        %v454 = vsub.s32 %v451, %v453
        %v455 = vrot.slane %v448, %v454
        %v456 = vcombine.low %v379, %v385
        %v458 = vunpack.c.l.s4 1983009808
        %v459 = vunpack.c.0.s8 %v458
        %v460 = vlaneseq
        %v461 = vshrl.u32 %v460, 7
        %v462 = vsub.s32 %v459, %v461
        %v463 = vrot.slane %v456, %v462
        %v464 = vcombine.low %v388, %v394
        %v466 = vunpack.c.l.s4 1983009808
        %v467 = vunpack.c.0.s8 %v466
        %v468 = vlaneseq
        %v469 = vshrl.u32 %v468, 7
        %v470 = vsub.s32 %v467, %v469
        %v471 = vrot.slane %v464, %v470
        %v472 = vcombine.low %v391, %v397
        %v474 = vunpack.c.l.s4 1983009808
        %v475 = vunpack.c.0.s8 %v474
        %v476 = vlaneseq
        %v477 = vshrl.u32 %v476, 7
        %v478 = vsub.s32 %v475, %v477
        %v479 = vrot.slane %v472, %v478
        %v480 = vcombine.low %v455, %v463
        %v482 = vunpack.c.l.s4 1934713408
        %v483 = vunpack.c.0.s8 %v482
        %v484 = vlaneseq
        %v485 = vshrl.u32 %v484, 7
        %v486 = vsub.s32 %v483, %v485
        %v487 = vrot.slane %v480, %v486
        %v488 = vcombine.low %v471, %v479
        %v490 = vunpack.c.l.s4 1934713408
        %v491 = vunpack.c.0.s8 %v490
        %v492 = vlaneseq
        %v493 = vshrl.u32 %v492, 7
        %v494 = vsub.s32 %v491, %v493
        %v495 = vrot.slane %v488, %v494
        %v496 = vcombine.low %v487, %v495
        %499 = vrot.lane.b32.xlu0 %v447, 3
        %v500 = vpop.permute.xlu0 %499
        %501 = vrot.lane.b32.xlu0 %v496, 3
        %v502 = vpop.permute.xlu0 %501
        %s505 = scalar_lea.vmem [#allocation2], 24
        %506 = vst.msk [vmem:[%s505 + $0x3] sm:$0xff] %vm352, %v500
        %507 = vst.msk [vmem:[%s505 + $0xb] sm:$0xff] %vm352, %v502
        %v508 = vld [vmem:[#allocation2] sm:$0xff]
        %v509 = vld [vmem:[#allocation2 + $0x8] sm:$0xff]
        %s510 = sld [smem:[#allocation3]]
        %v511 = vstv %s510
        %v512 = vmul.f32 %v508, %v511
        %v513 = vmul.f32 %v509, %v511
        %v514 = vadd.f32 %v512, 0.0
        %v515 = vadd.f32 %v513, 0.0
        %s516 = sld [smem:[#allocation3 + $0x2]]
        %v517 = vstv %s516
        %v518 = vmul.f32 %v508, %v517
        %v519 = vmul.f32 %v509, %v517
        %522 = vrot.lane.b32.xlu0 %v518, 127
        %v523 = vpop.permute.xlu0 %522
        %524 = vrot.lane.b32.xlu0 %v519, 127
        %v525 = vpop.permute.xlu0 %524
        %v528 = vadd.f32 %v514, %v523
        %v529 = vadd.f32 %v515, %v525
        %s530 = sld [smem:[#allocation3 + $0x4]]
        %v531 = vstv %s530
        %v532 = vmul.f32 %v508, %v531
        %v533 = vmul.f32 %v509, %v531
        %536 = vrot.lane.b32.xlu0 %v532, 126
        %v537 = vpop.permute.xlu0 %536
        %538 = vrot.lane.b32.xlu0 %v533, 126
        %v539 = vpop.permute.xlu0 %538
        %v542 = vadd.f32 %v528, %v537
        %v543 = vadd.f32 %v529, %v539
        %s544 = sld [smem:[#allocation3 + $0x6]]
        %v545 = vstv %s544
        %v546 = vmul.f32 %v508, %v545
        %v547 = vmul.f32 %v509, %v545
        %550 = vrot.lane.b32.xlu0 %v546, 125
        %v551 = vpop.permute.xlu0 %550
        %552 = vrot.lane.b32.xlu0 %v547, 125
        %v553 = vpop.permute.xlu0 %552
        %v556 = vadd.f32 %v542, %v551
        %v557 = vadd.f32 %v543, %v553
        %s558 = sld [smem:[#allocation3 + $0x8]]
        %v559 = vstv %s558
        %v560 = vmul.f32 %v508, %v559
        %v561 = vmul.f32 %v509, %v559
        %564 = vrot.lane.b32.xlu0 %v560, 124
        %v565 = vpop.permute.xlu0 %564
        %566 = vrot.lane.b32.xlu0 %v561, 124
        %v567 = vpop.permute.xlu0 %566
        %v570 = vadd.f32 %v556, %v565
        %v571 = vadd.f32 %v557, %v567
        %s572 = sld [smem:[#allocation3 + $0xa]]
        %v573 = vstv %s572
        %v574 = vmul.f32 %v508, %v573
        %v575 = vmul.f32 %v509, %v573
        %578 = vrot.lane.b32.xlu0 %v574, 123
        %v579 = vpop.permute.xlu0 %578
        %580 = vrot.lane.b32.xlu0 %v575, 123
        %v581 = vpop.permute.xlu0 %580
        %v584 = vadd.f32 %v570, %v579
        %v585 = vadd.f32 %v571, %v581
        %s586 = sld [smem:[#allocation3 + $0xc]]
        %v587 = vstv %s586
        %v588 = vmul.f32 %v508, %v587
        %v589 = vmul.f32 %v509, %v587
        %592 = vrot.lane.b32.xlu0 %v588, 122
        %v593 = vpop.permute.xlu0 %592
        %594 = vrot.lane.b32.xlu0 %v589, 122
        %v595 = vpop.permute.xlu0 %594
        %v598 = vadd.f32 %v584, %v593
        %v599 = vadd.f32 %v585, %v595
        %v600 = vld [vmem:[%s505] sm:$0xff]
        %v601 = vld [vmem:[%s505 + $0x8] sm:$0xff]
        %s602 = sld [smem:[#allocation3 + $0x1]]
        %v603 = vstv %s602
        %v604 = vmul.f32 %v600, %v603
        %v605 = vmul.f32 %v601, %v603
        %v606 = vadd.f32 %v604, 0.0
        %v607 = vadd.f32 %v605, 0.0
        %s608 = sld [smem:[#allocation3 + $0x3]]
        %v609 = vstv %s608
        %v610 = vmul.f32 %v600, %v609
        %v611 = vmul.f32 %v601, %v609
        %614 = vrot.lane.b32.xlu0 %v610, 127
        %v615 = vpop.permute.xlu0 %614
        %616 = vrot.lane.b32.xlu0 %v611, 127
        %v617 = vpop.permute.xlu0 %616
        %v620 = vadd.f32 %v606, %v615
        %v621 = vadd.f32 %v607, %v617
        %s622 = sld [smem:[#allocation3 + $0x5]]
        %v623 = vstv %s622
        %v624 = vmul.f32 %v600, %v623
        %v625 = vmul.f32 %v601, %v623
        %628 = vrot.lane.b32.xlu0 %v624, 126
        %v629 = vpop.permute.xlu0 %628
        %630 = vrot.lane.b32.xlu0 %v625, 126
        %v631 = vpop.permute.xlu0 %630
        %v634 = vadd.f32 %v620, %v629
        %v635 = vadd.f32 %v621, %v631
        %s636 = sld [smem:[#allocation3 + $0x7]]
        %v637 = vstv %s636
        %v638 = vmul.f32 %v600, %v637
        %v639 = vmul.f32 %v601, %v637
        %642 = vrot.lane.b32.xlu0 %v638, 125
        %v643 = vpop.permute.xlu0 %642
        %644 = vrot.lane.b32.xlu0 %v639, 125
        %v645 = vpop.permute.xlu0 %644
        %v648 = vadd.f32 %v634, %v643
        %v649 = vadd.f32 %v635, %v645
        %s650 = sld [smem:[#allocation3 + $0x9]]
        %v651 = vstv %s650
        %v652 = vmul.f32 %v600, %v651
        %v653 = vmul.f32 %v601, %v651
        %656 = vrot.lane.b32.xlu0 %v652, 124
        %v657 = vpop.permute.xlu0 %656
        %658 = vrot.lane.b32.xlu0 %v653, 124
        %v659 = vpop.permute.xlu0 %658
        %v662 = vadd.f32 %v648, %v657
        %v663 = vadd.f32 %v649, %v659
        %s664 = sld [smem:[#allocation3 + $0xb]]
        %v665 = vstv %s664
        %v666 = vmul.f32 %v600, %v665
        %v667 = vmul.f32 %v601, %v665
        %670 = vrot.lane.b32.xlu0 %v666, 123
        %v671 = vpop.permute.xlu0 %670
        %672 = vrot.lane.b32.xlu0 %v667, 123
        %v673 = vpop.permute.xlu0 %672
        %v676 = vadd.f32 %v662, %v671
        %v677 = vadd.f32 %v663, %v673
        %s678 = sld [smem:[#allocation3 + $0xd]]
        %v679 = vstv %s678
        %v680 = vmul.f32 %v600, %v679
        %v681 = vmul.f32 %v601, %v679
        %684 = vrot.lane.b32.xlu0 %v680, 122
        %v685 = vpop.permute.xlu0 %684
        %686 = vrot.lane.b32.xlu0 %v681, 122
        %v687 = vpop.permute.xlu0 %686
        %v690 = vadd.f32 %v676, %v685
        %v691 = vadd.f32 %v677, %v687
        %v692 = vld [vmem:[#allocation2 + $0x1] sm:$0xff]
        %v693 = vld [vmem:[#allocation2 + $0x9] sm:$0xff]
        %s694 = sld [smem:[#allocation3 + $0xe]]
        %v695 = vstv %s694
        %v696 = vmul.f32 %v692, %v695
        %v697 = vmul.f32 %v693, %v695
        %v698 = vadd.f32 %v696, 0.0
        %v699 = vadd.f32 %v697, 0.0
        %s700 = sld [smem:[#allocation3 + $0x10]]
        %v701 = vstv %s700
        %v702 = vmul.f32 %v692, %v701
        %v703 = vmul.f32 %v693, %v701
        %706 = vrot.lane.b32.xlu0 %v702, 127
        %v707 = vpop.permute.xlu0 %706
        %708 = vrot.lane.b32.xlu0 %v703, 127
        %v709 = vpop.permute.xlu0 %708
        %v712 = vadd.f32 %v698, %v707
        %v713 = vadd.f32 %v699, %v709
        %s714 = sld [smem:[#allocation3 + $0x12]]
        %v715 = vstv %s714
        %v716 = vmul.f32 %v692, %v715
        %v717 = vmul.f32 %v693, %v715
        %720 = vrot.lane.b32.xlu0 %v716, 126
        %v721 = vpop.permute.xlu0 %720
        %722 = vrot.lane.b32.xlu0 %v717, 126
        %v723 = vpop.permute.xlu0 %722
        %v726 = vadd.f32 %v712, %v721
        %v727 = vadd.f32 %v713, %v723
        %s728 = sld [smem:[#allocation3 + $0x14]]
        %v729 = vstv %s728
        %v730 = vmul.f32 %v692, %v729
        %v731 = vmul.f32 %v693, %v729
        %734 = vrot.lane.b32.xlu0 %v730, 125
        %v735 = vpop.permute.xlu0 %734
        %736 = vrot.lane.b32.xlu0 %v731, 125
        %v737 = vpop.permute.xlu0 %736
        %v740 = vadd.f32 %v726, %v735
        %v741 = vadd.f32 %v727, %v737
        %s742 = sld [smem:[#allocation3 + $0x16]]
        %v743 = vstv %s742
        %v744 = vmul.f32 %v692, %v743
        %v745 = vmul.f32 %v693, %v743
        %748 = vrot.lane.b32.xlu0 %v744, 124
        %v749 = vpop.permute.xlu0 %748
        %750 = vrot.lane.b32.xlu0 %v745, 124
        %v751 = vpop.permute.xlu0 %750
        %v754 = vadd.f32 %v740, %v749
        %v755 = vadd.f32 %v741, %v751
        %s756 = sld [smem:[#allocation3 + $0x18]]
        %v757 = vstv %s756
        %v758 = vmul.f32 %v692, %v757
        %v759 = vmul.f32 %v693, %v757
        %762 = vrot.lane.b32.xlu0 %v758, 123
        %v763 = vpop.permute.xlu0 %762
        %764 = vrot.lane.b32.xlu0 %v759, 123
        %v765 = vpop.permute.xlu0 %764
        %v768 = vadd.f32 %v754, %v763
        %v769 = vadd.f32 %v755, %v765
        %s770 = sld [smem:[#allocation3 + $0x1a]]
        %v771 = vstv %s770
        %v772 = vmul.f32 %v692, %v771
        %v773 = vmul.f32 %v693, %v771
        %776 = vrot.lane.b32.xlu0 %v772, 122
        %v777 = vpop.permute.xlu0 %776
        %778 = vrot.lane.b32.xlu0 %v773, 122
        %v779 = vpop.permute.xlu0 %778
        %v782 = vadd.f32 %v768, %v777
        %v783 = vadd.f32 %v769, %v779
        %v784 = vld [vmem:[%s505 + $0x1] sm:$0xff]
        %v785 = vld [vmem:[%s505 + $0x9] sm:$0xff]
        %s786 = sld [smem:[#allocation3 + $0xf]]
        %v787 = vstv %s786
        %v788 = vmul.f32 %v784, %v787
        %v789 = vmul.f32 %v785, %v787
        %v790 = vadd.f32 %v788, 0.0
        %v791 = vadd.f32 %v789, 0.0
        %s792 = sld [smem:[#allocation3 + $0x11]]
        %v793 = vstv %s792
        %v794 = vmul.f32 %v784, %v793
        %v795 = vmul.f32 %v785, %v793
        %798 = vrot.lane.b32.xlu0 %v794, 127
        %v799 = vpop.permute.xlu0 %798
        %800 = vrot.lane.b32.xlu0 %v795, 127
        %v801 = vpop.permute.xlu0 %800
        %v804 = vadd.f32 %v790, %v799
        %v805 = vadd.f32 %v791, %v801
        %s806 = sld [smem:[#allocation3 + $0x13]]
        %v807 = vstv %s806
        %v808 = vmul.f32 %v784, %v807
        %v809 = vmul.f32 %v785, %v807
        %812 = vrot.lane.b32.xlu0 %v808, 126
        %v813 = vpop.permute.xlu0 %812
        %814 = vrot.lane.b32.xlu0 %v809, 126
        %v815 = vpop.permute.xlu0 %814
        %v818 = vadd.f32 %v804, %v813
        %v819 = vadd.f32 %v805, %v815
        %s820 = sld [smem:[#allocation3 + $0x15]]
        %v821 = vstv %s820
        %v822 = vmul.f32 %v784, %v821
        %v823 = vmul.f32 %v785, %v821
        %826 = vrot.lane.b32.xlu0 %v822, 125
        %v827 = vpop.permute.xlu0 %826
        %828 = vrot.lane.b32.xlu0 %v823, 125
        %v829 = vpop.permute.xlu0 %828
        %v832 = vadd.f32 %v818, %v827
        %v833 = vadd.f32 %v819, %v829
        %s834 = sld [smem:[#allocation3 + $0x17]]
        %v835 = vstv %s834
        %v836 = vmul.f32 %v784, %v835
        %v837 = vmul.f32 %v785, %v835
        %840 = vrot.lane.b32.xlu0 %v836, 124
        %v841 = vpop.permute.xlu0 %840
        %842 = vrot.lane.b32.xlu0 %v837, 124
        %v843 = vpop.permute.xlu0 %842
        %v846 = vadd.f32 %v832, %v841
        %v847 = vadd.f32 %v833, %v843
        %s848 = sld [smem:[#allocation3 + $0x19]]
        %v849 = vstv %s848
        %v850 = vmul.f32 %v784, %v849
        %v851 = vmul.f32 %v785, %v849
        %854 = vrot.lane.b32.xlu0 %v850, 123
        %v855 = vpop.permute.xlu0 %854
        %856 = vrot.lane.b32.xlu0 %v851, 123
        %v857 = vpop.permute.xlu0 %856
        %v860 = vadd.f32 %v846, %v855
        %v861 = vadd.f32 %v847, %v857
        %s862 = sld [smem:[#allocation3 + $0x1b]]
        %v863 = vstv %s862
        %v864 = vmul.f32 %v784, %v863
        %v865 = vmul.f32 %v785, %v863
        %868 = vrot.lane.b32.xlu0 %v864, 122
        %v869 = vpop.permute.xlu0 %868
        %870 = vrot.lane.b32.xlu0 %v865, 122
        %v871 = vpop.permute.xlu0 %870
        %v874 = vadd.f32 %v860, %v869
        %v875 = vadd.f32 %v861, %v871
        %v876 = vld [vmem:[#allocation2 + $0x2] sm:$0xff]
        %v877 = vld [vmem:[#allocation2 + $0xa] sm:$0xff]
        %s878 = sld [smem:[#allocation3 + $0x1c]]
        %v879 = vstv %s878
        %v880 = vmul.f32 %v876, %v879
        %v881 = vmul.f32 %v877, %v879
        %v882 = vadd.f32 %v598, %v880
        %v883 = vadd.f32 %v599, %v881
        %s884 = sld [smem:[#allocation3 + $0x1e]]
        %v885 = vstv %s884
        %v886 = vmul.f32 %v876, %v885
        %v887 = vmul.f32 %v877, %v885
        %890 = vrot.lane.b32.xlu0 %v886, 127
        %v891 = vpop.permute.xlu0 %890
        %892 = vrot.lane.b32.xlu0 %v887, 127
        %v893 = vpop.permute.xlu0 %892
        %v896 = vadd.f32 %v882, %v891
        %v897 = vadd.f32 %v883, %v893
        %s898 = sld [smem:[#allocation3 + $0x20]]
        %v899 = vstv %s898
        %v900 = vmul.f32 %v876, %v899
        %v901 = vmul.f32 %v877, %v899
        %904 = vrot.lane.b32.xlu0 %v900, 126
        %v905 = vpop.permute.xlu0 %904
        %906 = vrot.lane.b32.xlu0 %v901, 126
        %v907 = vpop.permute.xlu0 %906
        %v910 = vadd.f32 %v896, %v905
        %v911 = vadd.f32 %v897, %v907
        %s912 = sld [smem:[#allocation3 + $0x22]]
        %v913 = vstv %s912
        %v914 = vmul.f32 %v876, %v913
        %v915 = vmul.f32 %v877, %v913
        %918 = vrot.lane.b32.xlu0 %v914, 125
        %v919 = vpop.permute.xlu0 %918
        %920 = vrot.lane.b32.xlu0 %v915, 125
        %v921 = vpop.permute.xlu0 %920
        %v924 = vadd.f32 %v910, %v919
        %v925 = vadd.f32 %v911, %v921
        %s926 = sld [smem:[#allocation3 + $0x24]]
        %v927 = vstv %s926
        %v928 = vmul.f32 %v876, %v927
        %v929 = vmul.f32 %v877, %v927
        %932 = vrot.lane.b32.xlu0 %v928, 124
        %v933 = vpop.permute.xlu0 %932
        %934 = vrot.lane.b32.xlu0 %v929, 124
        %v935 = vpop.permute.xlu0 %934
        %v938 = vadd.f32 %v924, %v933
        %v939 = vadd.f32 %v925, %v935
        %s940 = sld [smem:[#allocation3 + $0x26]]
        %v941 = vstv %s940
        %v942 = vmul.f32 %v876, %v941
        %v943 = vmul.f32 %v877, %v941
        %946 = vrot.lane.b32.xlu0 %v942, 123
        %v947 = vpop.permute.xlu0 %946
        %948 = vrot.lane.b32.xlu0 %v943, 123
        %v949 = vpop.permute.xlu0 %948
        %v952 = vadd.f32 %v938, %v947
        %v953 = vadd.f32 %v939, %v949
        %s954 = sld [smem:[#allocation3 + $0x28]]
        %v955 = vstv %s954
        %v956 = vmul.f32 %v876, %v955
        %v957 = vmul.f32 %v877, %v955
        %960 = vrot.lane.b32.xlu0 %v956, 122
        %v961 = vpop.permute.xlu0 %960
        %962 = vrot.lane.b32.xlu0 %v957, 122
        %v963 = vpop.permute.xlu0 %962
        %v966 = vadd.f32 %v952, %v961
        %v967 = vadd.f32 %v953, %v963
        %v968 = vld [vmem:[%s505 + $0x2] sm:$0xff]
        %v969 = vld [vmem:[%s505 + $0xa] sm:$0xff]
        %s970 = sld [smem:[#allocation3 + $0x1d]]
        %v971 = vstv %s970
        %v972 = vmul.f32 %v968, %v971
        %v973 = vmul.f32 %v969, %v971
        %v974 = vadd.f32 %v690, %v972
        %v975 = vadd.f32 %v691, %v973
        %s976 = sld [smem:[#allocation3 + $0x1f]]
        %v977 = vstv %s976
        %v978 = vmul.f32 %v968, %v977
        %v979 = vmul.f32 %v969, %v977
        %982 = vrot.lane.b32.xlu0 %v978, 127
        %v983 = vpop.permute.xlu0 %982
        %984 = vrot.lane.b32.xlu0 %v979, 127
        %v985 = vpop.permute.xlu0 %984
        %v988 = vadd.f32 %v974, %v983
        %v989 = vadd.f32 %v975, %v985
        %s990 = sld [smem:[#allocation3 + $0x21]]
        %v991 = vstv %s990
        %v992 = vmul.f32 %v968, %v991
        %v993 = vmul.f32 %v969, %v991
        %996 = vrot.lane.b32.xlu0 %v992, 126
        %v997 = vpop.permute.xlu0 %996
        %998 = vrot.lane.b32.xlu0 %v993, 126
        %v999 = vpop.permute.xlu0 %998
        %v1002 = vadd.f32 %v988, %v997
        %v1003 = vadd.f32 %v989, %v999
        %s1004 = sld [smem:[#allocation3 + $0x23]]
        %v1005 = vstv %s1004
        %v1006 = vmul.f32 %v968, %v1005
        %v1007 = vmul.f32 %v969, %v1005
        %1010 = vrot.lane.b32.xlu0 %v1006, 125
        %v1011 = vpop.permute.xlu0 %1010
        %1012 = vrot.lane.b32.xlu0 %v1007, 125
        %v1013 = vpop.permute.xlu0 %1012
        %v1016 = vadd.f32 %v1002, %v1011
        %v1017 = vadd.f32 %v1003, %v1013
        %s1018 = sld [smem:[#allocation3 + $0x25]]
        %v1019 = vstv %s1018
        %v1020 = vmul.f32 %v968, %v1019
        %v1021 = vmul.f32 %v969, %v1019
        %1024 = vrot.lane.b32.xlu0 %v1020, 124
        %v1025 = vpop.permute.xlu0 %1024
        %1026 = vrot.lane.b32.xlu0 %v1021, 124
        %v1027 = vpop.permute.xlu0 %1026
        %v1030 = vadd.f32 %v1016, %v1025
        %v1031 = vadd.f32 %v1017, %v1027
        %s1032 = sld [smem:[#allocation3 + $0x27]]
        %v1033 = vstv %s1032
        %v1034 = vmul.f32 %v968, %v1033
        %v1035 = vmul.f32 %v969, %v1033
        %1038 = vrot.lane.b32.xlu0 %v1034, 123
        %v1039 = vpop.permute.xlu0 %1038
        %1040 = vrot.lane.b32.xlu0 %v1035, 123
        %v1041 = vpop.permute.xlu0 %1040
        %v1044 = vadd.f32 %v1030, %v1039
        %v1045 = vadd.f32 %v1031, %v1041
        %s1046 = sld [smem:[#allocation3 + $0x29]]
        %v1047 = vstv %s1046
        %v1048 = vmul.f32 %v968, %v1047
        %v1049 = vmul.f32 %v969, %v1047
        %1052 = vrot.lane.b32.xlu0 %v1048, 122
        %v1053 = vpop.permute.xlu0 %1052
        %1054 = vrot.lane.b32.xlu0 %v1049, 122
        %v1055 = vpop.permute.xlu0 %1054
        %v1058 = vadd.f32 %v1044, %v1053
        %v1059 = vadd.f32 %v1045, %v1055
        %v1060 = vld [vmem:[#allocation2 + $0x3] sm:$0xff]
        %v1061 = vld [vmem:[#allocation2 + $0xb] sm:$0xff]
        %s1062 = sld [smem:[#allocation3 + $0x2a]]
        %v1063 = vstv %s1062
        %v1064 = vmul.f32 %v1060, %v1063
        %v1065 = vmul.f32 %v1061, %v1063
        %v1066 = vadd.f32 %v782, %v1064
        %v1067 = vadd.f32 %v783, %v1065
        %s1068 = sld [smem:[#allocation3 + $0x2c]]
        %v1069 = vstv %s1068
        %v1070 = vmul.f32 %v1060, %v1069
        %v1071 = vmul.f32 %v1061, %v1069
        %1074 = vrot.lane.b32.xlu0 %v1070, 127
        %v1075 = vpop.permute.xlu0 %1074
        %1076 = vrot.lane.b32.xlu0 %v1071, 127
        %v1077 = vpop.permute.xlu0 %1076
        %v1080 = vadd.f32 %v1066, %v1075
        %v1081 = vadd.f32 %v1067, %v1077
        %s1082 = sld [smem:[#allocation3 + $0x2e]]
        %v1083 = vstv %s1082
        %v1084 = vmul.f32 %v1060, %v1083
        %v1085 = vmul.f32 %v1061, %v1083
        %1088 = vrot.lane.b32.xlu0 %v1084, 126
        %v1089 = vpop.permute.xlu0 %1088
        %1090 = vrot.lane.b32.xlu0 %v1085, 126
        %v1091 = vpop.permute.xlu0 %1090
        %v1094 = vadd.f32 %v1080, %v1089
        %v1095 = vadd.f32 %v1081, %v1091
        %s1096 = sld [smem:[#allocation3 + $0x30]]
        %v1097 = vstv %s1096
        %v1098 = vmul.f32 %v1060, %v1097
        %v1099 = vmul.f32 %v1061, %v1097
        %1102 = vrot.lane.b32.xlu0 %v1098, 125
        %v1103 = vpop.permute.xlu0 %1102
        %1104 = vrot.lane.b32.xlu0 %v1099, 125
        %v1105 = vpop.permute.xlu0 %1104
        %v1108 = vadd.f32 %v1094, %v1103
        %v1109 = vadd.f32 %v1095, %v1105
        %s1110 = sld [smem:[#allocation3 + $0x32]]
        %v1111 = vstv %s1110
        %v1112 = vmul.f32 %v1060, %v1111
        %v1113 = vmul.f32 %v1061, %v1111
        %1116 = vrot.lane.b32.xlu0 %v1112, 124
        %v1117 = vpop.permute.xlu0 %1116
        %1118 = vrot.lane.b32.xlu0 %v1113, 124
        %v1119 = vpop.permute.xlu0 %1118
        %v1122 = vadd.f32 %v1108, %v1117
        %v1123 = vadd.f32 %v1109, %v1119
        %s1124 = sld [smem:[#allocation3 + $0x34]]
        %v1125 = vstv %s1124
        %v1126 = vmul.f32 %v1060, %v1125
        %v1127 = vmul.f32 %v1061, %v1125
        %1130 = vrot.lane.b32.xlu0 %v1126, 123
        %v1131 = vpop.permute.xlu0 %1130
        %1132 = vrot.lane.b32.xlu0 %v1127, 123
        %v1133 = vpop.permute.xlu0 %1132
        %v1136 = vadd.f32 %v1122, %v1131
        %v1137 = vadd.f32 %v1123, %v1133
        %s1138 = sld [smem:[#allocation3 + $0x36]]
        %v1139 = vstv %s1138
        %v1140 = vmul.f32 %v1060, %v1139
        %v1141 = vmul.f32 %v1061, %v1139
        %1144 = vrot.lane.b32.xlu0 %v1140, 122
        %v1145 = vpop.permute.xlu0 %1144
        %1146 = vrot.lane.b32.xlu0 %v1141, 122
        %v1147 = vpop.permute.xlu0 %1146
        %v1150 = vadd.f32 %v1136, %v1145
        %v1151 = vadd.f32 %v1137, %v1147
        %v1152 = vld [vmem:[%s505 + $0x3] sm:$0xff]
        %v1153 = vld [vmem:[%s505 + $0xb] sm:$0xff]
        %s1154 = sld [smem:[#allocation3 + $0x2b]]
        %v1155 = vstv %s1154
        %v1156 = vmul.f32 %v1152, %v1155
        %v1157 = vmul.f32 %v1153, %v1155
        %v1158 = vadd.f32 %v874, %v1156
        %v1159 = vadd.f32 %v875, %v1157
        %s1160 = sld [smem:[#allocation3 + $0x2d]]
        %v1161 = vstv %s1160
        %v1162 = vmul.f32 %v1152, %v1161
        %v1163 = vmul.f32 %v1153, %v1161
        %1166 = vrot.lane.b32.xlu0 %v1162, 127
        %v1167 = vpop.permute.xlu0 %1166
        %1168 = vrot.lane.b32.xlu0 %v1163, 127
        %v1169 = vpop.permute.xlu0 %1168
        %v1172 = vadd.f32 %v1158, %v1167
        %v1173 = vadd.f32 %v1159, %v1169
        %s1174 = sld [smem:[#allocation3 + $0x2f]]
        %v1175 = vstv %s1174
        %v1176 = vmul.f32 %v1152, %v1175
        %v1177 = vmul.f32 %v1153, %v1175
        %1180 = vrot.lane.b32.xlu0 %v1176, 126
        %v1181 = vpop.permute.xlu0 %1180
        %1182 = vrot.lane.b32.xlu0 %v1177, 126
        %v1183 = vpop.permute.xlu0 %1182
        %v1186 = vadd.f32 %v1172, %v1181
        %v1187 = vadd.f32 %v1173, %v1183
        %s1188 = sld [smem:[#allocation3 + $0x31]]
        %v1189 = vstv %s1188
        %v1190 = vmul.f32 %v1152, %v1189
        %v1191 = vmul.f32 %v1153, %v1189
        %1194 = vrot.lane.b32.xlu0 %v1190, 125
        %v1195 = vpop.permute.xlu0 %1194
        %1196 = vrot.lane.b32.xlu0 %v1191, 125
        %v1197 = vpop.permute.xlu0 %1196
        %v1200 = vadd.f32 %v1186, %v1195
        %v1201 = vadd.f32 %v1187, %v1197
        %s1202 = sld [smem:[#allocation3 + $0x33]]
        %v1203 = vstv %s1202
        %v1204 = vmul.f32 %v1152, %v1203
        %v1205 = vmul.f32 %v1153, %v1203
        %1208 = vrot.lane.b32.xlu0 %v1204, 124
        %v1209 = vpop.permute.xlu0 %1208
        %1210 = vrot.lane.b32.xlu0 %v1205, 124
        %v1211 = vpop.permute.xlu0 %1210
        %v1214 = vadd.f32 %v1200, %v1209
        %v1215 = vadd.f32 %v1201, %v1211
        %s1216 = sld [smem:[#allocation3 + $0x35]]
        %v1217 = vstv %s1216
        %v1218 = vmul.f32 %v1152, %v1217
        %v1219 = vmul.f32 %v1153, %v1217
        %1222 = vrot.lane.b32.xlu0 %v1218, 123
        %v1223 = vpop.permute.xlu0 %1222
        %1224 = vrot.lane.b32.xlu0 %v1219, 123
        %v1225 = vpop.permute.xlu0 %1224
        %v1228 = vadd.f32 %v1214, %v1223
        %v1229 = vadd.f32 %v1215, %v1225
        %s1230 = sld [smem:[#allocation3 + $0x37]]
        %v1231 = vstv %s1230
        %v1232 = vmul.f32 %v1152, %v1231
        %v1233 = vmul.f32 %v1153, %v1231
        %1236 = vrot.lane.b32.xlu0 %v1232, 122
        %v1237 = vpop.permute.xlu0 %1236
        %1238 = vrot.lane.b32.xlu0 %v1233, 122
        %v1239 = vpop.permute.xlu0 %1238
        %v1242 = vadd.f32 %v1228, %v1237
        %v1243 = vadd.f32 %v1229, %v1239
        %v1244 = vld [vmem:[#allocation2 + $0x4] sm:$0xff]
        %v1245 = vld [vmem:[#allocation2 + $0xc] sm:$0xff]
        %s1246 = sld [smem:[#allocation3 + $0x38]]
        %v1247 = vstv %s1246
        %v1248 = vmul.f32 %v1244, %v1247
        %v1249 = vmul.f32 %v1245, %v1247
        %v1250 = vadd.f32 %v966, %v1248
        %v1251 = vadd.f32 %v967, %v1249
        %s1252 = sld [smem:[#allocation3 + $0x3a]]
        %v1253 = vstv %s1252
        %v1254 = vmul.f32 %v1244, %v1253
        %v1255 = vmul.f32 %v1245, %v1253
        %1258 = vrot.lane.b32.xlu0 %v1254, 127
        %v1259 = vpop.permute.xlu0 %1258
        %1260 = vrot.lane.b32.xlu0 %v1255, 127
        %v1261 = vpop.permute.xlu0 %1260
        %v1264 = vadd.f32 %v1250, %v1259
        %v1265 = vadd.f32 %v1251, %v1261
        %s1266 = sld [smem:[#allocation3 + $0x3c]]
        %v1267 = vstv %s1266
        %v1268 = vmul.f32 %v1244, %v1267
        %v1269 = vmul.f32 %v1245, %v1267
        %1272 = vrot.lane.b32.xlu0 %v1268, 126
        %v1273 = vpop.permute.xlu0 %1272
        %1274 = vrot.lane.b32.xlu0 %v1269, 126
        %v1275 = vpop.permute.xlu0 %1274
        %v1278 = vadd.f32 %v1264, %v1273
        %v1279 = vadd.f32 %v1265, %v1275
        %s1280 = sld [smem:[#allocation3 + $0x3e]]
        %v1281 = vstv %s1280
        %v1282 = vmul.f32 %v1244, %v1281
        %v1283 = vmul.f32 %v1245, %v1281
        %1286 = vrot.lane.b32.xlu0 %v1282, 125
        %v1287 = vpop.permute.xlu0 %1286
        %1288 = vrot.lane.b32.xlu0 %v1283, 125
        %v1289 = vpop.permute.xlu0 %1288
        %v1292 = vadd.f32 %v1278, %v1287
        %v1293 = vadd.f32 %v1279, %v1289
        %s1294 = sld [smem:[#allocation3 + $0x40]]
        %v1295 = vstv %s1294
        %v1296 = vmul.f32 %v1244, %v1295
        %v1297 = vmul.f32 %v1245, %v1295
        %1300 = vrot.lane.b32.xlu0 %v1296, 124
        %v1301 = vpop.permute.xlu0 %1300
        %1302 = vrot.lane.b32.xlu0 %v1297, 124
        %v1303 = vpop.permute.xlu0 %1302
        %v1306 = vadd.f32 %v1292, %v1301
        %v1307 = vadd.f32 %v1293, %v1303
        %s1308 = sld [smem:[#allocation3 + $0x42]]
        %v1309 = vstv %s1308
        %v1310 = vmul.f32 %v1244, %v1309
        %v1311 = vmul.f32 %v1245, %v1309
        %1314 = vrot.lane.b32.xlu0 %v1310, 123
        %v1315 = vpop.permute.xlu0 %1314
        %1316 = vrot.lane.b32.xlu0 %v1311, 123
        %v1317 = vpop.permute.xlu0 %1316
        %v1320 = vadd.f32 %v1306, %v1315
        %v1321 = vadd.f32 %v1307, %v1317
        %s1322 = sld [smem:[#allocation3 + $0x44]]
        %v1323 = vstv %s1322
        %v1324 = vmul.f32 %v1244, %v1323
        %v1325 = vmul.f32 %v1245, %v1323
        %1328 = vrot.lane.b32.xlu0 %v1324, 122
        %v1329 = vpop.permute.xlu0 %1328
        %1330 = vrot.lane.b32.xlu0 %v1325, 122
        %v1331 = vpop.permute.xlu0 %1330
        %v1334 = vadd.f32 %v1320, %v1329
        %v1335 = vadd.f32 %v1321, %v1331
        %v1336 = vld [vmem:[%s505 + $0x4] sm:$0xff]
        %v1337 = vld [vmem:[%s505 + $0xc] sm:$0xff]
        %s1338 = sld [smem:[#allocation3 + $0x39]]
        %v1339 = vstv %s1338
        %v1340 = vmul.f32 %v1336, %v1339
        %v1341 = vmul.f32 %v1337, %v1339
        %v1342 = vadd.f32 %v1058, %v1340
        %v1343 = vadd.f32 %v1059, %v1341
        %s1344 = sld [smem:[#allocation3 + $0x3b]]
        %v1345 = vstv %s1344
        %v1346 = vmul.f32 %v1336, %v1345
        %v1347 = vmul.f32 %v1337, %v1345
        %1350 = vrot.lane.b32.xlu0 %v1346, 127
        %v1351 = vpop.permute.xlu0 %1350
        %1352 = vrot.lane.b32.xlu0 %v1347, 127
        %v1353 = vpop.permute.xlu0 %1352
        %v1356 = vadd.f32 %v1342, %v1351
        %v1357 = vadd.f32 %v1343, %v1353
        %s1358 = sld [smem:[#allocation3 + $0x3d]]
        %v1359 = vstv %s1358
        %v1360 = vmul.f32 %v1336, %v1359
        %v1361 = vmul.f32 %v1337, %v1359
        %1364 = vrot.lane.b32.xlu0 %v1360, 126
        %v1365 = vpop.permute.xlu0 %1364
        %1366 = vrot.lane.b32.xlu0 %v1361, 126
        %v1367 = vpop.permute.xlu0 %1366
        %v1370 = vadd.f32 %v1356, %v1365
        %v1371 = vadd.f32 %v1357, %v1367
        %s1372 = sld [smem:[#allocation3 + $0x3f]]
        %v1373 = vstv %s1372
        %v1374 = vmul.f32 %v1336, %v1373
        %v1375 = vmul.f32 %v1337, %v1373
        %1378 = vrot.lane.b32.xlu0 %v1374, 125
        %v1379 = vpop.permute.xlu0 %1378
        %1380 = vrot.lane.b32.xlu0 %v1375, 125
        %v1381 = vpop.permute.xlu0 %1380
        %v1384 = vadd.f32 %v1370, %v1379
        %v1385 = vadd.f32 %v1371, %v1381
        %s1386 = sld [smem:[#allocation3 + $0x41]]
        %v1387 = vstv %s1386
        %v1388 = vmul.f32 %v1336, %v1387
        %v1389 = vmul.f32 %v1337, %v1387
        %1392 = vrot.lane.b32.xlu0 %v1388, 124
        %v1393 = vpop.permute.xlu0 %1392
        %1394 = vrot.lane.b32.xlu0 %v1389, 124
        %v1395 = vpop.permute.xlu0 %1394
        %v1398 = vadd.f32 %v1384, %v1393
        %v1399 = vadd.f32 %v1385, %v1395
        %s1400 = sld [smem:[#allocation3 + $0x43]]
        %v1401 = vstv %s1400
        %v1402 = vmul.f32 %v1336, %v1401
        %v1403 = vmul.f32 %v1337, %v1401
        %1406 = vrot.lane.b32.xlu0 %v1402, 123
        %v1407 = vpop.permute.xlu0 %1406
        %1408 = vrot.lane.b32.xlu0 %v1403, 123
        %v1409 = vpop.permute.xlu0 %1408
        %v1412 = vadd.f32 %v1398, %v1407
        %v1413 = vadd.f32 %v1399, %v1409
        %s1414 = sld [smem:[#allocation3 + $0x45]]
        %v1415 = vstv %s1414
        %v1416 = vmul.f32 %v1336, %v1415
        %v1417 = vmul.f32 %v1337, %v1415
        %1420 = vrot.lane.b32.xlu0 %v1416, 122
        %v1421 = vpop.permute.xlu0 %1420
        %1422 = vrot.lane.b32.xlu0 %v1417, 122
        %v1423 = vpop.permute.xlu0 %1422
        %v1426 = vadd.f32 %v1412, %v1421
        %v1427 = vadd.f32 %v1413, %v1423
        %v1428 = vld [vmem:[#allocation2 + $0x5] sm:$0xff]
        %v1429 = vld [vmem:[#allocation2 + $0xd] sm:$0xff]
        %s1430 = sld [smem:[#allocation3 + $0x46]]
        %v1431 = vstv %s1430
        %v1432 = vmul.f32 %v1428, %v1431
        %v1433 = vmul.f32 %v1429, %v1431
        %v1434 = vadd.f32 %v1150, %v1432
        %v1435 = vadd.f32 %v1151, %v1433
        %s1436 = sld [smem:[#allocation3 + $0x48]]
        %v1437 = vstv %s1436
        %v1438 = vmul.f32 %v1428, %v1437
        %v1439 = vmul.f32 %v1429, %v1437
        %1442 = vrot.lane.b32.xlu0 %v1438, 127
        %v1443 = vpop.permute.xlu0 %1442
        %1444 = vrot.lane.b32.xlu0 %v1439, 127
        %v1445 = vpop.permute.xlu0 %1444
        %v1448 = vadd.f32 %v1434, %v1443
        %v1449 = vadd.f32 %v1435, %v1445
        %s1450 = sld [smem:[#allocation3 + $0x4a]]
        %v1451 = vstv %s1450
        %v1452 = vmul.f32 %v1428, %v1451
        %v1453 = vmul.f32 %v1429, %v1451
        %1456 = vrot.lane.b32.xlu0 %v1452, 126
        %v1457 = vpop.permute.xlu0 %1456
        %1458 = vrot.lane.b32.xlu0 %v1453, 126
        %v1459 = vpop.permute.xlu0 %1458
        %v1462 = vadd.f32 %v1448, %v1457
        %v1463 = vadd.f32 %v1449, %v1459
        %s1464 = sld [smem:[#allocation3 + $0x4c]]
        %v1465 = vstv %s1464
        %v1466 = vmul.f32 %v1428, %v1465
        %v1467 = vmul.f32 %v1429, %v1465
        %1470 = vrot.lane.b32.xlu0 %v1466, 125
        %v1471 = vpop.permute.xlu0 %1470
        %1472 = vrot.lane.b32.xlu0 %v1467, 125
        %v1473 = vpop.permute.xlu0 %1472
        %v1476 = vadd.f32 %v1462, %v1471
        %v1477 = vadd.f32 %v1463, %v1473
        %s1478 = sld [smem:[#allocation3 + $0x4e]]
        %v1479 = vstv %s1478
        %v1480 = vmul.f32 %v1428, %v1479
        %v1481 = vmul.f32 %v1429, %v1479
        %1484 = vrot.lane.b32.xlu0 %v1480, 124
        %v1485 = vpop.permute.xlu0 %1484
        %1486 = vrot.lane.b32.xlu0 %v1481, 124
        %v1487 = vpop.permute.xlu0 %1486
        %v1490 = vadd.f32 %v1476, %v1485
        %v1491 = vadd.f32 %v1477, %v1487
        %s1492 = sld [smem:[#allocation3 + $0x50]]
        %v1493 = vstv %s1492
        %v1494 = vmul.f32 %v1428, %v1493
        %v1495 = vmul.f32 %v1429, %v1493
        %1498 = vrot.lane.b32.xlu0 %v1494, 123
        %v1499 = vpop.permute.xlu0 %1498
        %1500 = vrot.lane.b32.xlu0 %v1495, 123
        %v1501 = vpop.permute.xlu0 %1500
        %v1504 = vadd.f32 %v1490, %v1499
        %v1505 = vadd.f32 %v1491, %v1501
        %s1506 = sld [smem:[#allocation3 + $0x52]]
        %v1507 = vstv %s1506
        %v1508 = vmul.f32 %v1428, %v1507
        %v1509 = vmul.f32 %v1429, %v1507
        %1512 = vrot.lane.b32.xlu0 %v1508, 122
        %v1513 = vpop.permute.xlu0 %1512
        %1514 = vrot.lane.b32.xlu0 %v1509, 122
        %v1515 = vpop.permute.xlu0 %1514
        %v1518 = vadd.f32 %v1504, %v1513
        %v1519 = vadd.f32 %v1505, %v1515
        %v1520 = vld [vmem:[%s505 + $0x5] sm:$0xff]
        %v1521 = vld [vmem:[%s505 + $0xd] sm:$0xff]
        %s1522 = sld [smem:[#allocation3 + $0x47]]
        %v1523 = vstv %s1522
        %v1524 = vmul.f32 %v1520, %v1523
        %v1525 = vmul.f32 %v1521, %v1523
        %v1526 = vadd.f32 %v1242, %v1524
        %v1527 = vadd.f32 %v1243, %v1525
        %s1528 = sld [smem:[#allocation3 + $0x49]]
        %v1529 = vstv %s1528
        %v1530 = vmul.f32 %v1520, %v1529
        %v1531 = vmul.f32 %v1521, %v1529
        %1534 = vrot.lane.b32.xlu0 %v1530, 127
        %v1535 = vpop.permute.xlu0 %1534
        %1536 = vrot.lane.b32.xlu0 %v1531, 127
        %v1537 = vpop.permute.xlu0 %1536
        %v1540 = vadd.f32 %v1526, %v1535
        %v1541 = vadd.f32 %v1527, %v1537
        %s1542 = sld [smem:[#allocation3 + $0x4b]]
        %v1543 = vstv %s1542
        %v1544 = vmul.f32 %v1520, %v1543
        %v1545 = vmul.f32 %v1521, %v1543
        %1548 = vrot.lane.b32.xlu0 %v1544, 126
        %v1549 = vpop.permute.xlu0 %1548
        %1550 = vrot.lane.b32.xlu0 %v1545, 126
        %v1551 = vpop.permute.xlu0 %1550
        %v1554 = vadd.f32 %v1540, %v1549
        %v1555 = vadd.f32 %v1541, %v1551
        %s1556 = sld [smem:[#allocation3 + $0x4d]]
        %v1557 = vstv %s1556
        %v1558 = vmul.f32 %v1520, %v1557
        %v1559 = vmul.f32 %v1521, %v1557
        %1562 = vrot.lane.b32.xlu0 %v1558, 125
        %v1563 = vpop.permute.xlu0 %1562
        %1564 = vrot.lane.b32.xlu0 %v1559, 125
        %v1565 = vpop.permute.xlu0 %1564
        %v1568 = vadd.f32 %v1554, %v1563
        %v1569 = vadd.f32 %v1555, %v1565
        %s1570 = sld [smem:[#allocation3 + $0x4f]]
        %v1571 = vstv %s1570
        %v1572 = vmul.f32 %v1520, %v1571
        %v1573 = vmul.f32 %v1521, %v1571
        %1576 = vrot.lane.b32.xlu0 %v1572, 124
        %v1577 = vpop.permute.xlu0 %1576
        %1578 = vrot.lane.b32.xlu0 %v1573, 124
        %v1579 = vpop.permute.xlu0 %1578
        %v1582 = vadd.f32 %v1568, %v1577
        %v1583 = vadd.f32 %v1569, %v1579
        %s1584 = sld [smem:[#allocation3 + $0x51]]
        %v1585 = vstv %s1584
        %v1586 = vmul.f32 %v1520, %v1585
        %v1587 = vmul.f32 %v1521, %v1585
        %1590 = vrot.lane.b32.xlu0 %v1586, 123
        %v1591 = vpop.permute.xlu0 %1590
        %1592 = vrot.lane.b32.xlu0 %v1587, 123
        %v1593 = vpop.permute.xlu0 %1592
        %v1596 = vadd.f32 %v1582, %v1591
        %v1597 = vadd.f32 %v1583, %v1593
        %s1598 = sld [smem:[#allocation3 + $0x53]]
        %v1599 = vstv %s1598
        %v1600 = vmul.f32 %v1520, %v1599
        %v1601 = vmul.f32 %v1521, %v1599
        %1604 = vrot.lane.b32.xlu0 %v1600, 122
        %v1605 = vpop.permute.xlu0 %1604
        %1606 = vrot.lane.b32.xlu0 %v1601, 122
        %v1607 = vpop.permute.xlu0 %1606
        %v1610 = vadd.f32 %v1596, %v1605
        %v1611 = vadd.f32 %v1597, %v1607
        %v1612 = vld [vmem:[#allocation2 + $0x6] sm:$0xff]
        %v1613 = vld [vmem:[#allocation2 + $0xe] sm:$0xff]
        %s1614 = sld [smem:[#allocation3 + $0x54]]
        %v1615 = vstv %s1614
        %v1616 = vmul.f32 %v1612, %v1615
        %v1617 = vmul.f32 %v1613, %v1615
        %v1618 = vadd.f32 %v1334, %v1616
        %v1619 = vadd.f32 %v1335, %v1617
        %s1620 = sld [smem:[#allocation3 + $0x56]]
        %v1621 = vstv %s1620
        %v1622 = vmul.f32 %v1612, %v1621
        %v1623 = vmul.f32 %v1613, %v1621
        %1626 = vrot.lane.b32.xlu0 %v1622, 127
        %v1627 = vpop.permute.xlu0 %1626
        %1628 = vrot.lane.b32.xlu0 %v1623, 127
        %v1629 = vpop.permute.xlu0 %1628
        %v1632 = vadd.f32 %v1618, %v1627
        %v1633 = vadd.f32 %v1619, %v1629
        %s1634 = sld [smem:[#allocation3 + $0x58]]
        %v1635 = vstv %s1634
        %v1636 = vmul.f32 %v1612, %v1635
        %v1637 = vmul.f32 %v1613, %v1635
        %1640 = vrot.lane.b32.xlu0 %v1636, 126
        %v1641 = vpop.permute.xlu0 %1640
        %1642 = vrot.lane.b32.xlu0 %v1637, 126
        %v1643 = vpop.permute.xlu0 %1642
        %v1646 = vadd.f32 %v1632, %v1641
        %v1647 = vadd.f32 %v1633, %v1643
        %s1648 = sld [smem:[#allocation3 + $0x5a]]
        %v1649 = vstv %s1648
        %v1650 = vmul.f32 %v1612, %v1649
        %v1651 = vmul.f32 %v1613, %v1649
        %1654 = vrot.lane.b32.xlu0 %v1650, 125
        %v1655 = vpop.permute.xlu0 %1654
        %1656 = vrot.lane.b32.xlu0 %v1651, 125
        %v1657 = vpop.permute.xlu0 %1656
        %v1660 = vadd.f32 %v1646, %v1655
        %v1661 = vadd.f32 %v1647, %v1657
        %s1662 = sld [smem:[#allocation3 + $0x5c]]
        %v1663 = vstv %s1662
        %v1664 = vmul.f32 %v1612, %v1663
        %v1665 = vmul.f32 %v1613, %v1663
        %1668 = vrot.lane.b32.xlu0 %v1664, 124
        %v1669 = vpop.permute.xlu0 %1668
        %1670 = vrot.lane.b32.xlu0 %v1665, 124
        %v1671 = vpop.permute.xlu0 %1670
        %v1674 = vadd.f32 %v1660, %v1669
        %v1675 = vadd.f32 %v1661, %v1671
        %s1676 = sld [smem:[#allocation3 + $0x5e]]
        %v1677 = vstv %s1676
        %v1678 = vmul.f32 %v1612, %v1677
        %v1679 = vmul.f32 %v1613, %v1677
        %1682 = vrot.lane.b32.xlu0 %v1678, 123
        %v1683 = vpop.permute.xlu0 %1682
        %1684 = vrot.lane.b32.xlu0 %v1679, 123
        %v1685 = vpop.permute.xlu0 %1684
        %v1688 = vadd.f32 %v1674, %v1683
        %v1689 = vadd.f32 %v1675, %v1685
        %s1690 = sld [smem:[#allocation3 + $0x60]]
        %v1691 = vstv %s1690
        %v1692 = vmul.f32 %v1612, %v1691
        %v1693 = vmul.f32 %v1613, %v1691
        %1696 = vrot.lane.b32.xlu0 %v1692, 122
        %v1697 = vpop.permute.xlu0 %1696
        %1698 = vrot.lane.b32.xlu0 %v1693, 122
        %v1699 = vpop.permute.xlu0 %1698
        %v1702 = vadd.f32 %v1688, %v1697
        %v1703 = vadd.f32 %v1689, %v1699
        %v1704 = vld [vmem:[%s505 + $0x6] sm:$0xff]
        %v1705 = vld [vmem:[%s505 + $0xe] sm:$0xff]
        %s1706 = sld [smem:[#allocation3 + $0x55]]
        %v1707 = vstv %s1706
        %v1708 = vmul.f32 %v1704, %v1707
        %v1709 = vmul.f32 %v1705, %v1707
        %v1710 = vadd.f32 %v1426, %v1708
        %v1711 = vadd.f32 %v1427, %v1709
        %s1712 = sld [smem:[#allocation3 + $0x57]]
        %v1713 = vstv %s1712
        %v1714 = vmul.f32 %v1704, %v1713
        %v1715 = vmul.f32 %v1705, %v1713
        %1718 = vrot.lane.b32.xlu0 %v1714, 127
        %v1719 = vpop.permute.xlu0 %1718
        %1720 = vrot.lane.b32.xlu0 %v1715, 127
        %v1721 = vpop.permute.xlu0 %1720
        %v1724 = vadd.f32 %v1710, %v1719
        %v1725 = vadd.f32 %v1711, %v1721
        %s1726 = sld [smem:[#allocation3 + $0x59]]
        %v1727 = vstv %s1726
        %v1728 = vmul.f32 %v1704, %v1727
        %v1729 = vmul.f32 %v1705, %v1727
        %1732 = vrot.lane.b32.xlu0 %v1728, 126
        %v1733 = vpop.permute.xlu0 %1732
        %1734 = vrot.lane.b32.xlu0 %v1729, 126
        %v1735 = vpop.permute.xlu0 %1734
        %v1738 = vadd.f32 %v1724, %v1733
        %v1739 = vadd.f32 %v1725, %v1735
        %s1740 = sld [smem:[#allocation3 + $0x5b]]
        %v1741 = vstv %s1740
        %v1742 = vmul.f32 %v1704, %v1741
        %v1743 = vmul.f32 %v1705, %v1741
        %1746 = vrot.lane.b32.xlu0 %v1742, 125
        %v1747 = vpop.permute.xlu0 %1746
        %1748 = vrot.lane.b32.xlu0 %v1743, 125
        %v1749 = vpop.permute.xlu0 %1748
        %v1752 = vadd.f32 %v1738, %v1747
        %v1753 = vadd.f32 %v1739, %v1749
        %s1754 = sld [smem:[#allocation3 + $0x5d]]
        %v1755 = vstv %s1754
        %v1756 = vmul.f32 %v1704, %v1755
        %v1757 = vmul.f32 %v1705, %v1755
        %1760 = vrot.lane.b32.xlu0 %v1756, 124
        %v1761 = vpop.permute.xlu0 %1760
        %1762 = vrot.lane.b32.xlu0 %v1757, 124
        %v1763 = vpop.permute.xlu0 %1762
        %v1766 = vadd.f32 %v1752, %v1761
        %v1767 = vadd.f32 %v1753, %v1763
        %s1768 = sld [smem:[#allocation3 + $0x5f]]
        %v1769 = vstv %s1768
        %v1770 = vmul.f32 %v1704, %v1769
        %v1771 = vmul.f32 %v1705, %v1769
        %1774 = vrot.lane.b32.xlu0 %v1770, 123
        %v1775 = vpop.permute.xlu0 %1774
        %1776 = vrot.lane.b32.xlu0 %v1771, 123
        %v1777 = vpop.permute.xlu0 %1776
        %v1780 = vadd.f32 %v1766, %v1775
        %v1781 = vadd.f32 %v1767, %v1777
        %s1782 = sld [smem:[#allocation3 + $0x61]]
        %v1783 = vstv %s1782
        %v1784 = vmul.f32 %v1704, %v1783
        %v1785 = vmul.f32 %v1705, %v1783
        %1788 = vrot.lane.b32.xlu0 %v1784, 122
        %v1789 = vpop.permute.xlu0 %1788
        %1790 = vrot.lane.b32.xlu0 %v1785, 122
        %v1791 = vpop.permute.xlu0 %1790
        %v1794 = vadd.f32 %v1780, %v1789
        %v1795 = vadd.f32 %v1781, %v1791
        %v1796 = vadd.f32 %v1702, %v1794
        %v1797 = vadd.f32 %v1703, %v1795
        %v1798 = vadd.f32 %v1518, %v1610
        %v1799 = vadd.f32 %v1519, %v1611
        %v1800 = vadd.f32 %v1796, %v1798
        %v1801 = vadd.f32 %v1797, %v1799
        %v1802 = vsub.f32 0.0, %v1800
        %v1803 = vsub.f32 0.0, %v1801
        %v1804 = vmul.f32 %v1802, 1.442695
        %v1805 = vpow.pop %v1804
        %v1806 = vmul.f32 %v1803, 1.442695
        %v1807 = vpow.pop %v1806
        %v1808 = vadd.f32 %v1805, 1.0
        %v1809 = vadd.f32 %v1807, 1.0
        %v1810 = vrcp.pop %v1808
        %v1811 = vmul.f32 1.0, %v1810
        %v1812 = vrcp.pop %v1809
        %v1813 = vmul.f32 1.0, %v1812
        %v1814 = vcombine.high %v1811, 0.0
        %v1816 = vunpack.c.l.s4 1983009808
        %v1817 = vunpack.c.0.s8 %v1816
        %v1818 = vlaneseq
        %v1819 = vshrl.u32 %v1818, 7
        %v1820 = vsub.s32 %v1817, %v1819
        %v1821 = vrot.slane %v1811, %v1820
        %v1823 = vunpack.c.l.s4 1983009808
        %v1824 = vunpack.c.0.s8 %v1823
        %v1825 = vlaneseq
        %v1826 = vshrl.u32 %v1825, 7
        %v1827 = vsub.s32 %v1824, %v1826
        %v1828 = vrot.slane %v1814, %v1827
        %v1829 = vcombine.high %v1821, 0.0
        %v1831 = vunpack.c.l.s4 1934713408
        %v1832 = vunpack.c.0.s8 %v1831
        %v1833 = vlaneseq
        %v1834 = vshrl.u32 %v1833, 7
        %v1835 = vsub.s32 %v1832, %v1834
        %v1836 = vrot.slane %v1821, %v1835
        %v1838 = vunpack.c.l.s4 1934713408
        %v1839 = vunpack.c.0.s8 %v1838
        %v1840 = vlaneseq
        %v1841 = vshrl.u32 %v1840, 7
        %v1842 = vsub.s32 %v1839, %v1841
        %v1843 = vrot.slane %v1829, %v1842
        %v1844 = vcombine.high %v1828, 0.0
        %v1846 = vunpack.c.l.s4 1934713408
        %v1847 = vunpack.c.0.s8 %v1846
        %v1848 = vlaneseq
        %v1849 = vshrl.u32 %v1848, 7
        %v1850 = vsub.s32 %v1847, %v1849
        %v1851 = vrot.slane %v1828, %v1850
        %v1853 = vunpack.c.l.s4 1934713408
        %v1854 = vunpack.c.0.s8 %v1853
        %v1855 = vlaneseq
        %v1856 = vshrl.u32 %v1855, 7
        %v1857 = vsub.s32 %v1854, %v1856
        %v1858 = vrot.slane %v1844, %v1857
        %v1859 = vcombine.high %v1836, 0.0
        %v1860 = vcombine.high %v1843, 0.0
        %v1861 = vcombine.high %v1851, 0.0
        %v1862 = vcombine.high %v1858, 0.0
        %v1863 = vcombine.high %v1813, 0.0
        %v1865 = vunpack.c.l.s4 1983009808
        %v1866 = vunpack.c.0.s8 %v1865
        %v1867 = vlaneseq
        %v1868 = vshrl.u32 %v1867, 7
        %v1869 = vsub.s32 %v1866, %v1868
        %v1870 = vrot.slane %v1813, %v1869
        %v1872 = vunpack.c.l.s4 1983009808
        %v1873 = vunpack.c.0.s8 %v1872
        %v1874 = vlaneseq
        %v1875 = vshrl.u32 %v1874, 7
        %v1876 = vsub.s32 %v1873, %v1875
        %v1877 = vrot.slane %v1863, %v1876
        %v1878 = vcombine.high %v1870, 0.0
        %v1880 = vunpack.c.l.s4 1934713408
        %v1881 = vunpack.c.0.s8 %v1880
        %v1882 = vlaneseq
        %v1883 = vshrl.u32 %v1882, 7
        %v1884 = vsub.s32 %v1881, %v1883
        %v1885 = vrot.slane %v1870, %v1884
        %v1887 = vunpack.c.l.s4 1934713408
        %v1888 = vunpack.c.0.s8 %v1887
        %v1889 = vlaneseq
        %v1890 = vshrl.u32 %v1889, 7
        %v1891 = vsub.s32 %v1888, %v1890
        %v1892 = vrot.slane %v1878, %v1891
        %v1893 = vcombine.high %v1877, 0.0
        %v1895 = vunpack.c.l.s4 1934713408
        %v1896 = vunpack.c.0.s8 %v1895
        %v1897 = vlaneseq
        %v1898 = vshrl.u32 %v1897, 7
        %v1899 = vsub.s32 %v1896, %v1898
        %v1900 = vrot.slane %v1877, %v1899
        %v1902 = vunpack.c.l.s4 1934713408
        %v1903 = vunpack.c.0.s8 %v1902
        %v1904 = vlaneseq
        %v1905 = vshrl.u32 %v1904, 7
        %v1906 = vsub.s32 %v1903, %v1905
        %v1907 = vrot.slane %v1893, %v1906
        %v1908 = vcombine.high %v1885, 0.0
        %v1909 = vcombine.high %v1892, 0.0
        %v1910 = vcombine.high %v1900, 0.0
        %v1911 = vcombine.high %v1907, 0.0
        %1913 = vrot.lane.b32.xlu0 %v1859, 16
        %v1914 = vpop.permute.xlu0 %1913
        %1917 = vrot.lane.b32.xlu0 %v1843, 32
        %v1918 = vpop.permute.xlu0 %1917
        %1921 = vrot.lane.b32.xlu0 %v1860, 48
        %v1922 = vpop.permute.xlu0 %1921
        %1925 = vrot.lane.b32.xlu0 %v1851, 64
        %v1926 = vpop.permute.xlu0 %1925
        %1929 = vrot.lane.b32.xlu0 %v1861, 80
        %v1930 = vpop.permute.xlu0 %1929
        %1933 = vrot.lane.b32.xlu0 %v1858, 96
        %v1934 = vpop.permute.xlu0 %1933
        %1937 = vrot.lane.b32.xlu0 %v1862, 112
        %v1938 = vpop.permute.xlu0 %1937
        %1941 = vrot.lane.b32.xlu0 %v1908, 16
        %v1942 = vpop.permute.xlu0 %1941
        %1945 = vrot.lane.b32.xlu0 %v1892, 32
        %v1946 = vpop.permute.xlu0 %1945
        %1949 = vrot.lane.b32.xlu0 %v1909, 48
        %v1950 = vpop.permute.xlu0 %1949
        %1953 = vrot.lane.b32.xlu0 %v1900, 64
        %v1954 = vpop.permute.xlu0 %1953
        %1957 = vrot.lane.b32.xlu0 %v1910, 80
        %v1958 = vpop.permute.xlu0 %1957
        %1961 = vrot.lane.b32.xlu0 %v1907, 96
        %v1962 = vpop.permute.xlu0 %1961
        %1965 = vrot.lane.b32.xlu0 %v1911, 112
        %v1966 = vpop.permute.xlu0 %1965
        %vm1968 = vcmask 130048
        %v1969 = vsel %vm1968, %v1836, %v1914
        %vm1970 = vcmask 261120
        %v1971 = vsel %vm1970, %v1969, %v1918
        %vm1972 = vcmask 392192
        %v1973 = vsel %vm1972, %v1971, %v1922
        %vm1974 = vcmask 523264
        %v1975 = vsel %vm1974, %v1973, %v1926
        %vm1976 = vcmask 654336
        %v1977 = vsel %vm1976, %v1975, %v1930
        %vm1978 = vcmask 785408
        %v1979 = vsel %vm1978, %v1977, %v1934
        %vm1980 = vcmask 916480
        %v1981 = vsel %vm1980, %v1979, %v1938
        %v1982 = vsel %vm1968, %v1885, %v1942
        %v1983 = vsel %vm1970, %v1982, %v1946
        %v1984 = vsel %vm1972, %v1983, %v1950
        %v1985 = vsel %vm1974, %v1984, %v1954
        %v1986 = vsel %vm1976, %v1985, %v1958
        %v1987 = vsel %vm1978, %v1986, %v1962
        %v1988 = vsel %vm1980, %v1987, %v1966
        %v1989 = vlaneseq
        %v1990 = vshrl.u32 %v1989, 7
        %v1991 = vsub.s32 0, %v1990
        %v1992 = vrot.slane %v1981, %v1991
        %v1993 = vlaneseq
        %v1994 = vshrl.u32 %v1993, 7
        %v1995 = vsub.s32 0, %v1994
        %v1996 = vrot.slane %v1988, %v1995
        %v1997 = vmul.f32 %v158, %v1992
        %v1998 = vmul.f32 %v159, %v1996
        %1999 = vst [vmem:[%s157] sm:$0xff] %v1997
        %2000 = vst [vmem:[%s157 + $0x8] sm:$0xff] %v1998
        %p2001 = scmp.lt.s32.totalorder %s14, 1
        %s2002 = scalar_select %p2001, %s14, 1
        %s2003 = smul.addr %s2002, 2
        %s2004 = smul.addr %s2003, 8
        %s2005 = scalar_lea.vmem %s2, %s2004
        // Predicated region
        $region33: #{sam.1} parent=27 // pred_check
          %p2006 = pneg %p79
        $region34: #{sam.1} parent=27 // pred_check_branch
          %2008 = sbr.rel (%p2006) target = $region36
        $region35: #{sam.1} parent=27 // pred_region
          _
        $region36: #{sam.1} parent=27 // pred_fallthru
          _
      $region28: #{sam.1} parent=5 // pred_fallthru
        _
      %p2009 = scmp.le.s32.totalorder 2, %s9
      // Predicated region
      $region37: #{sam.1} parent=5 // pred_check
        %p2010 = pneg %p2009
      $region38: #{sam.1} parent=5 // pred_check_branch
        %2012 = sbr.rel (%p2010) target = $region40
      $region39: #{sam.1} parent=5 // pred_region
        %s2013 = ssub.s32 %s9, 2
        // Predicated region
        $region41: #{sam.1} parent=39 // pred_check
          %p2014 = pneg %p85
        $region42: #{sam.1} parent=39 // pred_check_branch
          %2016 = sbr.rel (%p2014) target = $region44
        $region43: #{sam.1} parent=39 // pred_region
          %p2017 = scmp.lt.s32.totalorder %s15, 1
          %s2018 = scalar_select %p2017, %s15, 1
          %s2019 = smul.addr %s2018, 2
          %s2020 = smul.addr %s2019, 8
          %s2021 = scalar_lea.vmem %s2, %s2020
        $region44: #{sam.1} parent=39 // pred_fallthru
          _
      $region40: #{sam.1} parent=5 // pred_fallthru
        _
    $region6: #{sam.1} parent=1 // loop_footer
      %s13 = sadd.s32 1, %s9
    $region7: #{sam.1} parent=1 // loop_footer_branch
      %8 = sbr.rel target = $region3
    $region8: #{sam.1} parent=1 // loop_exit
      _
    %2022 = vsyncpa [#allocation4], 1
    %s2023 = scalar_lea.sflag [#allocation4], 1
    %2024 = vsyncpa %s2023, 1

</llo_original>
